<compile_context>
chip_gen: v5e
topology: v5e:2x2
jax: 0.10.0
libtpu: 0.0.40
codegen_flags: <defaults>
</compile_context>

<pallas_src>
import functools

import jax
import jax.numpy as jnp
from jax.experimental import pallas as pl
from jax.experimental.pallas import tpu as pltpu


EXPANSION = 4

_MIN_VMEM = 16 * 1024 * 1024
_MAX_VMEM = 56 * 1024 * 1024   # stay under v7x's 64 MiB/TC physical VMEM


def _vmem_limit(estimate_bytes):
    # Explicit scoped-VMEM budget (v7x halves per-TC VMEM vs v5e/v6e).
    return int(min(max(int(1.5 * estimate_bytes), _MIN_VMEM), _MAX_VMEM))


def _pick_tn(n):
    # Lane-dense output tiles: multiples of 128, else the full (exempt) dim.
    if n % 256 == 0:
        return 256
    if n % 128 == 0:
        return 128
    return n


def _pick_tm(m):
    # Bigger tiles amortize the ~0.35us/step overhead (512 ~ 85%, 1024 ~ 86%
    # of HBM roofline for mem-bound streams); remainder tiles are masked.
    if m >= 1024:
        return 1024
    if m >= 512:
        return 512
    return m


# ----------------------------- Pallas kernels ----------------------------- #

def _mm_bn_kernel(x_ref, w_ref, sb_ref, o_ref, *, apply_relu):
    # (TM, K) @ (K, TN) on the MXU (bf16 in, f32 accumulate); folded-BN epilogue
    # kept in f32 (v5e has no bf16 VALU path). sb_ref packs [scale; bias].
    acc = jnp.dot(x_ref[...], w_ref[...], preferred_element_type=jnp.float32)
    y = acc * sb_ref[0:1, :] + sb_ref[1:2, :]
    if apply_relu:
        y = jnp.maximum(y, 0.0)
    o_ref[...] = y.astype(o_ref.dtype)


def _mm_bn_add_relu_kernel(x_ref, w_ref, sb_ref, r_ref, o_ref):
    # Final 1x1 conv + BN + residual add + ReLU, fully fused; the residual
    # streams in tile-by-tile (bf16) with the same (TM, TN) blocking as the output.
    acc = jnp.dot(x_ref[...], w_ref[...], preferred_element_type=jnp.float32)
    y = acc * sb_ref[0:1, :] + sb_ref[1:2, :] + r_ref[...].astype(jnp.float32)
    o_ref[...] = jnp.maximum(y, 0.0).astype(o_ref.dtype)


def _conv3x3_bn_relu_kernel(x_ref, w_ref, sb_ref, o_ref, *, Ho, Wo, C, Hh, stride):
    # 3x3 conv (pad=1) as a 9-tap matmul accumulation over a phase-decomposed
    # (space-to-depth) padded input block -> no 9x im2col tensor in HBM.
    # x_ref: (1, s*s*Hh, Wh, C) bf16 ; w_ref: (9, C, Cout) bf16.
    # Output written as a flat (1, Ho*Wo, Cout) tile (lane-dense, no 4-D relayout).
    cout = w_ref.shape[-1]
    acc = jnp.zeros((Ho * Wo, cout), jnp.float32)
    for dh in range(3):
        for dw in range(3):
            ph, oh = dh % stride, dh // stride
            pw, ow = dw % stride, dw // stride
            base = (ph * stride + pw) * Hh
            win = x_ref[0, base + oh:base + oh + Ho, ow:ow + Wo, :]   # (Ho, Wo, C)
            acc = acc + jnp.dot(win.reshape(Ho * Wo, C), w_ref[dh * 3 + dw],
                                preferred_element_type=jnp.float32)
    y = jnp.maximum(acc * sb_ref[0:1, :] + sb_ref[1:2, :], 0.0)
    o_ref[...] = y[None, :, :].astype(o_ref.dtype)


# ----------------------------- kernel wrappers ----------------------------- #

def matmul_bn(x, w, scale, bias, *, relu, out_dtype=jnp.float32):
    """x: (M, K), w: (K, N), scale/bias: (N,) -> act(x @ w * scale + bias)."""
    M, K = x.shape
    N = w.shape[1]
    x = x.astype(jnp.bfloat16)
    w = w.astype(jnp.bfloat16)
    sb = jnp.stack([scale.astype(jnp.float32), bias.astype(jnp.float32)])  # (2, N)

    TM = _pick_tm(M)
    TN = _pick_tn(N)
    grid = (pl.cdiv(M, TM), pl.cdiv(N, TN))

    out_bytes = jnp.dtype(out_dtype).itemsize
    vmem_est = 2 * (TM * K * 2 + K * TN * 2 + 2 * TN * 4 + TM * TN * out_bytes)
    cost = pl.CostEstimate(flops=2 * M * K * N, transcendentals=0,
                           bytes_accessed=M * K * 2 + K * N * 2 + M * N * out_bytes)

    return pl.pallas_call(
        functools.partial(_mm_bn_kernel, apply_relu=relu),
        out_shape=jax.ShapeDtypeStruct((M, N), out_dtype),
        grid=grid,
        in_specs=[
            pl.BlockSpec((TM, K), lambda i, j: (i, 0)),    # activations stream over i
            pl.BlockSpec((K, TN), lambda i, j: (0, j)),    # weights resident across i
            pl.BlockSpec((2, TN), lambda i, j: (0, j)),    # packed folded-BN scale+bias
        ],
        out_specs=pl.BlockSpec((TM, TN), lambda i, j: (i, j)),
        compiler_params=pltpu.CompilerParams(
            dimension_semantics=("parallel", "parallel"),
            vmem_limit_bytes=_vmem_limit(vmem_est)),
        cost_estimate=cost,
    )(x, w, sb)


def matmul_bn_add_relu(x, w, scale, bias, residual, *, out_dtype=jnp.float32):
    """relu(x @ w * scale + bias + residual), residual tiled like the output."""
    M, K = x.shape
    N = w.shape[1]
    x = x.astype(jnp.bfloat16)
    w = w.astype(jnp.bfloat16)
    sb = jnp.stack([scale.astype(jnp.float32), bias.astype(jnp.float32)])  # (2, N)
    residual = residual.astype(jnp.bfloat16)   # halve residual stream bandwidth

    TM = _pick_tm(M)
    TN = _pick_tn(N)
    grid = (pl.cdiv(M, TM), pl.cdiv(N, TN))

    out_bytes = jnp.dtype(out_dtype).itemsize
    vmem_est = 2 * (TM * K * 2 + K * TN * 2 + 2 * TN * 4
                    + TM * TN * (out_bytes + 2))
    cost = pl.CostEstimate(flops=2 * M * K * N + M * N, transcendentals=0,
                           bytes_accessed=M * K * 2 + K * N * 2
                           + M * N * (out_bytes + 2))

    return pl.pallas_call(
        _mm_bn_add_relu_kernel,
        out_shape=jax.ShapeDtypeStruct((M, N), out_dtype),
        grid=grid,
        in_specs=[
            pl.BlockSpec((TM, K), lambda i, j: (i, 0)),
            pl.BlockSpec((K, TN), lambda i, j: (0, j)),    # weights resident across i
            pl.BlockSpec((2, TN), lambda i, j: (0, j)),    # packed folded-BN scale+bias
            pl.BlockSpec((TM, TN), lambda i, j: (i, j)),   # residual, output tiling
        ],
        out_specs=pl.BlockSpec((TM, TN), lambda i, j: (i, j)),
        compiler_params=pltpu.CompilerParams(
            dimension_semantics=("parallel", "parallel"),
            vmem_limit_bytes=_vmem_limit(vmem_est)),
        cost_estimate=cost,
    )(x, w, sb, residual)


def _space_to_depth_pad(y, stride):
    """(N,H,W,C) -> pad=1 then phase-decompose -> (N, s*s*Hh, Wh, C).

    Phase p = ph*s + pw occupies rows [p*Hh, (p+1)*Hh) and holds
    y_pad[:, ph::s, pw::s, :], so every 3x3 tap becomes an UNstrided window.
    Total HBM bytes ~= y_pad (vs 9x for im2col).
    """
    n, h, w, c = y.shape
    s = stride
    yp = jnp.pad(y, ((0, 0), (1, 1), (1, 1), (0, 0)))
    hp, wp = h + 2, w + 2
    hh, wh = -(-hp // s), -(-wp // s)
    yp = jnp.pad(yp, ((0, 0), (0, hh * s - hp), (0, wh * s - wp), (0, 0)))
    yp = yp.reshape(n, hh, s, wh, s, c)
    yp = jnp.transpose(yp, (0, 2, 4, 1, 3, 5)).reshape(n, s * s * hh, wh, c)
    return yp, hh, wh


def conv3x3_bn_relu(y, w_oihw, scale, bias, stride, *, out_dtype=jnp.bfloat16):
    """3x3 conv (pad=1, stride) + folded BN + ReLU. y: (N,H,W,C) NHWC."""
    n, h, w, c = y.shape
    cout = w_oihw.shape[0]
    s = stride
    ho = (h + 2 - 3) // s + 1
    wo = (w + 2 - 3) // s + 1

    xph, hh, wh = _space_to_depth_pad(y.astype(jnp.bfloat16), s)
    wk = jnp.transpose(w_oihw, (2, 3, 1, 0)).reshape(9, c, cout).astype(jnp.bfloat16)
    sb = jnp.stack([scale.astype(jnp.float32), bias.astype(jnp.float32)])   # (2, cout)

    out_bytes = jnp.dtype(out_dtype).itemsize
    vmem_est = (2 * (s * s * hh * wh * c * 2 + 9 * c * cout * 2
                     + ho * wo * cout * out_bytes)
                + ho * wo * cout * 4)
    cost = pl.CostEstimate(flops=2 * n * ho * wo * 9 * c * cout, transcendentals=0,
                           bytes_accessed=xph.size * 2 + wk.size * 2
                           + n * ho * wo * cout * out_bytes)

    kernel = functools.partial(_conv3x3_bn_relu_kernel,
                               Ho=ho, Wo=wo, C=c, Hh=hh, stride=s)
    out = pl.pallas_call(
        kernel,
        out_shape=jax.ShapeDtypeStruct((n, ho * wo, cout), out_dtype),
        grid=(n,),
        in_specs=[
            pl.BlockSpec((1, s * s * hh, wh, c), lambda i: (i, 0, 0, 0)),
            pl.BlockSpec((9, c, cout), lambda i: (0, 0, 0)),   # weights resident
            pl.BlockSpec((2, cout), lambda i: (0, 0)),         # packed scale+bias
        ],
        out_specs=pl.BlockSpec((1, ho * wo, cout), lambda i: (i, 0, 0)),
        compiler_params=pltpu.CompilerParams(
            dimension_semantics=("parallel",),
            vmem_limit_bytes=_vmem_limit(vmem_est)),
        cost_estimate=cost,
    )(xph, wk, sb)
    return out.reshape(n, ho, wo, cout)


# ------------------------------- JAX glue ---------------------------------- #

def _fold_bn(gamma, beta, mean, var, eps=1e-5):
    scale = gamma / jnp.sqrt(var + eps)
    shift = beta - mean * scale
    return scale, shift


def bottleneck_forward(x_nchw, params, stride):
    """Forward pass matching the PyTorch Bottleneck module (eval-mode BN)."""
    x = jnp.transpose(x_nchw, (0, 2, 3, 1)).astype(jnp.float32)  # NCHW -> NHWC
    N, H, W, Cin = x.shape
    zip_c = params["w1"].shape[0]
    out_c = EXPANSION * zip_c

    # conv1: 1x1, Cin -> zip_c, + BN + ReLU
    s1, b1 = _fold_bn(*params["bn1"])
    w1 = params["w1"].reshape(zip_c, Cin).T                       # (Cin, zip)
    y1 = matmul_bn(x.reshape(-1, Cin), w1, s1, b1, relu=True,
                   out_dtype=jnp.bfloat16)
    y1 = y1.reshape(N, H, W, zip_c)

    # conv2: 3x3, stride, pad=1, zip_c -> zip_c, + BN + ReLU (fused 9-tap kernel)
    s2, b2 = _fold_bn(*params["bn2"])
    y2 = conv3x3_bn_relu(y1, params["w2"], s2, b2, stride, out_dtype=jnp.bfloat16)
    _, Ho, Wo, _ = y2.shape

    # shortcut
    if stride != 1 or Cin != out_c:
        xs = x[:, ::stride, ::stride, :]          # spatial subsample for 1x1 stride conv
        ss, bs = _fold_bn(*params["bns"])
        ws = params["ws"].reshape(out_c, Cin).T   # (Cin, out_c)
        res = matmul_bn(xs.reshape(-1, Cin), ws, ss, bs, relu=False,
                        out_dtype=jnp.bfloat16)
    else:
        res = x.reshape(-1, Cin)                  # identity (Cin == out_c)

    # conv3: 1x1, zip_c -> out_c, + BN + residual + ReLU (fused)
    s3, b3 = _fold_bn(*params["bn3"])
    w3 = params["w3"].reshape(out_c, zip_c).T     # (zip, out_c)
    out = matmul_bn_add_relu(y2.reshape(-1, zip_c), w3, s3, b3, res,
                             out_dtype=jnp.float32)
    out = out.reshape(N, Ho, Wo, out_c)
    return jnp.transpose(out, (0, 3, 1, 2))       # NHWC -> NCHW


# --------------------------- reference (pure JAX) --------------------------- #

def _ref_conv(x, w, stride=1, padding=0):
    return jax.lax.conv_general_dilated(
        x, w, (stride, stride), [(padding, padding), (padding, padding)],
        dimension_numbers=("NCHW", "OIHW", "NCHW"))


def _ref_bn(x, gamma, beta, mean, var, eps=1e-5):
    def b(v):
        return v[None, :, None, None]
    return (x - b(mean)) / jnp.sqrt(b(var) + eps) * b(gamma) + b(beta)


def bottleneck_reference(x, params, stride):
    out_c = EXPANSION * params["w1"].shape[0]
    y = jax.nn.relu(_ref_bn(_ref_conv(x, params["w1"]), *params["bn1"]))
    y = jax.nn.relu(_ref_bn(_ref_conv(y, params["w2"], stride, 1), *params["bn2"]))
    y = _ref_bn(_ref_conv(y, params["w3"]), *params["bn3"])
    if stride != 1 or x.shape[1] != out_c:
        sc = _ref_bn(_ref_conv(x, params["ws"], stride), *params["bns"])
    else:
        sc = x
    return jax.nn.relu(y + sc)


# --------------------------------- main ------------------------------------ #

def _make_params(key, in_channels, zip_channels):
    out_channels = EXPANSION * zip_channels
    ks = jax.random.split(key, 16)

    def bn(k, c):
        k1, k2, k3, k4 = jax.random.split(k, 4)
        gamma = 1.0 + 0.1 * jax.random.normal(k1, (c,), jnp.float32)
        beta = 0.1 * jax.random.normal(k2, (c,), jnp.float32)
        mean = 0.1 * jax.random.normal(k3, (c,), jnp.float32)
        var = jnp.abs(jax.random.normal(k4, (c,), jnp.float32)) + 0.5
        return (gamma, beta, mean, var)

    return {
        "w1": 0.2 * jax.random.normal(ks[0], (zip_channels, in_channels, 1, 1), jnp.float32),
        "bn1": bn(ks[1], zip_channels),
        "w2": 0.2 * jax.random.normal(ks[2], (zip_channels, zip_channels, 3, 3), jnp.float32),
        "bn2": bn(ks[3], zip_channels),
        "w3": 0.2 * jax.random.normal(ks[4], (out_channels, zip_channels, 1, 1), jnp.float32),
        "bn3": bn(ks[5], out_channels),
        "ws": 0.2 * jax.random.normal(ks[6], (out_channels, in_channels, 1, 1), jnp.float32),
        "bns": bn(ks[7], out_channels),
    }


if __name__ == "__main__":
    key = jax.random.PRNGKey(0)
    k_x, k_p = jax.random.split(key)

    # small shapes: batch=2, in_channels=4, spatial=16, zip_channels=4, stride=2
    N, Cin, H, W = 2, 4, 16, 16
    zip_channels, stride = 4, 2

    x = jax.random.normal(k_x, (N, Cin, H, W), jnp.float32)   # NCHW, like PyTorch
    params = _make_params(k_p, Cin, zip_channels)

    fwd = jax.jit(bottleneck_forward, static_argnums=2)
    out = jax.block_until_ready(fwd(x, params, stride))

    ref = jax.block_until_ready(bottleneck_reference(x, params, stride))
    assert out.shape == ref.shape == (N, EXPANSION * zip_channels, H // stride, W // stride)
    # bf16 matmul operands / residual (f32 accumulation + f32 epilogue) need a
    # looser tolerance than the original all-f32 path.
    assert jnp.allclose(out, ref, rtol=5e-2, atol=5e-2), "mismatch vs JAX reference"

    print("KERNEL_OK")
</pallas_src>

<mosaic_0001>
module attributes {stable_mosaic.version = 11 : i64} {
  func.func @_mm_bn_kernel(%arg0: i32, %arg1: i32, %arg2: memref<512x4xbf16, #tpu.memory_space<vmem>>, %arg3: memref<4x4xbf16, #tpu.memory_space<vmem>>, %arg4: memref<2x4xf32, #tpu.memory_space<vmem>>, %arg5: memref<512x4xbf16, #tpu.memory_space<vmem>>) attributes {dimension_semantics = [#tpu.dimension_semantics<parallel>, #tpu.dimension_semantics<parallel>], iteration_bounds = array<i64: 1, 1>, scalar_prefetch = 0 : i64, scratch_operands = 0 : i64, tpu.core_type = #tpu.core_type<tc>, window_params = [{transform_indices = @transform_0, window_bounds = array<i64: 512, 4>}, {transform_indices = @transform_1, window_bounds = array<i64: 4, 4>}, {transform_indices = @transform_2, window_bounds = array<i64: 2, 4>}, {transform_indices = @transform_3, window_bounds = array<i64: 512, 4>}]} {
    %c0 = arith.constant 0 : index
    %c0_0 = arith.constant 0 : index
    %0 = vector.load %arg2[%c0, %c0_0] : memref<512x4xbf16, #tpu.memory_space<vmem>>, vector<512x4xbf16>
    %c0_1 = arith.constant 0 : index
    %c0_2 = arith.constant 0 : index
    %1 = vector.load %arg3[%c0_1, %c0_2] : memref<4x4xbf16, #tpu.memory_space<vmem>>, vector<4x4xbf16>
    %cst = arith.constant dense<0.000000e+00> : vector<512x4xf32>
    %2 = tpu.matmul %0, %1, %cst {dimension_numbers = #tpu.dot_dimension_numbers<[1], [0], [0], [1], [0, 0, 1, 1], [], []>} : vector<512x4xbf16>, vector<4x4xbf16>, vector<512x4xf32> -> vector<512x4xf32>
    %c0_3 = arith.constant 0 : index
    %c0_4 = arith.constant 0 : index
    %3 = vector.load %arg4[%c0_3, %c0_4] : memref<2x4xf32, #tpu.memory_space<vmem>>, vector<1x4xf32>
    %4 = vector.broadcast %3 : vector<1x4xf32> to vector<512x4xf32>
    %5 = arith.mulf %2, %4 : vector<512x4xf32>
    %c1 = arith.constant 1 : index
    %c0_5 = arith.constant 0 : index
    %6 = vector.load %arg4[%c1, %c0_5] : memref<2x4xf32, #tpu.memory_space<vmem>>, vector<1x4xf32>
    %7 = vector.broadcast %6 : vector<1x4xf32> to vector<512x4xf32>
    %8 = arith.addf %5, %7 : vector<512x4xf32>
    %cst_6 = arith.constant 0.000000e+00 : f32
    %9 = vector.broadcast %cst_6 : f32 to vector<512x4xf32>
    %10 = arith.maximumf %8, %9 : vector<512x4xf32>
    %11 = arith.truncf %10 : vector<512x4xf32> to vector<512x4xbf16>
    %c0_7 = arith.constant 0 : index
    %c0_8 = arith.constant 0 : index
    %12 = vector.load %arg5[%c0_7, %c0_8] : memref<512x4xbf16, #tpu.memory_space<vmem>>, vector<512x4xbf16>
    tpu.vector_store %arg5[%c0_7, %c0_8], %11 {strides = array<i32>} : memref<512x4xbf16, #tpu.memory_space<vmem>>, vector<512x4xbf16>,
    return
  }
  func.func @transform_0(%arg0: i32, %arg1: i32) -> (i32, i32) {
    %c0_i32 = arith.constant 0 : i32
    %c0_i32_0 = arith.constant 0 : i32
    return %arg0, %c0_i32 : i32, i32
  }
  func.func @transform_1(%arg0: i32, %arg1: i32) -> (i32, i32) {
    %c0_i32 = arith.constant 0 : i32
    %c0_i32_0 = arith.constant 0 : i32
    return %c0_i32, %arg1 : i32, i32
  }
  func.func @transform_2(%arg0: i32, %arg1: i32) -> (i32, i32) {
    %c0_i32 = arith.constant 0 : i32
    %c0_i32_0 = arith.constant 0 : i32
    return %c0_i32, %arg1 : i32, i32
  }
  func.func @transform_3(%arg0: i32, %arg1: i32) -> (i32, i32) {
    %c0_i32 = arith.constant 0 : i32
    return %arg0, %arg1 : i32, i32
  }
}

module attributes {stable_mosaic.version = 11 : i64} {
  func.func @_conv3x3_bn_relu_kernel(%arg0: i32, %arg1: memref<1x36x9x4xbf16, #tpu.memory_space<vmem>>, %arg2: memref<9x4x4xbf16, #tpu.memory_space<vmem>>, %arg3: memref<2x4xf32, #tpu.memory_space<vmem>>, %arg4: memref<1x64x4xbf16, #tpu.memory_space<vmem>>) attributes {dimension_semantics = [#tpu.dimension_semantics<parallel>], iteration_bounds = array<i64: 2>, scalar_prefetch = 0 : i64, scratch_operands = 0 : i64, tpu.core_type = #tpu.core_type<tc>, window_params = [{transform_indices = @transform_0, window_bounds = array<i64: 1, 36, 9, 4>}, {pipeline_mode = #tpu.pipeline_mode<synchronous>, transform_indices = @transform_1, window_bounds = array<i64: 9, 4, 4>}, {pipeline_mode = #tpu.pipeline_mode<synchronous>, transform_indices = @transform_2, window_bounds = array<i64: 2, 4>}, {transform_indices = @transform_3, window_bounds = array<i64: 1, 64, 4>}]} {
    %cst = arith.constant 0.000000e+00 : f32
    %0 = vector.broadcast %cst : f32 to vector<64x4xf32>
    %c0 = arith.constant 0 : index
    %c0_0 = arith.constant 0 : index
    %c0_1 = arith.constant 0 : index
    %c0_2 = arith.constant 0 : index
    %1 = vector.load %arg1[%c0, %c0_0, %c0_1, %c0_2] : memref<1x36x9x4xbf16, #tpu.memory_space<vmem>>, vector<1x8x8x4xbf16>
    %2 = vector.shape_cast %1 : vector<1x8x8x4xbf16> to vector<8x8x4xbf16>
    %3 = vector.shape_cast %2 : vector<8x8x4xbf16> to vector<64x4xbf16>
    %c0_3 = arith.constant 0 : index
    %c0_4 = arith.constant 0 : index
    %c0_5 = arith.constant 0 : index
    %4 = vector.load %arg2[%c0_3, %c0_4, %c0_5] : memref<9x4x4xbf16, #tpu.memory_space<vmem>>, vector<1x4x4xbf16>
    %5 = vector.shape_cast %4 : vector<1x4x4xbf16> to vector<4x4xbf16>
    %cst_6 = arith.constant dense<0.000000e+00> : vector<64x4xf32>
    %6 = tpu.matmul %3, %5, %cst_6 {dimension_numbers = #tpu.dot_dimension_numbers<[1], [0], [0], [1], [0, 0, 1, 1], [], []>} : vector<64x4xbf16>, vector<4x4xbf16>, vector<64x4xf32> -> vector<64x4xf32>
    %7 = arith.addf %0, %6 : vector<64x4xf32>
    %c0_7 = arith.constant 0 : index
    %c9 = arith.constant 9 : index
    %c0_8 = arith.constant 0 : index
    %c0_9 = arith.constant 0 : index
    %8 = vector.load %arg1[%c0_7, %c9, %c0_8, %c0_9] : memref<1x36x9x4xbf16, #tpu.memory_space<vmem>>, vector<1x8x8x4xbf16>
    %9 = vector.shape_cast %8 : vector<1x8x8x4xbf16> to vector<8x8x4xbf16>
    %10 = vector.shape_cast %9 : vector<8x8x4xbf16> to vector<64x4xbf16>
    %c1 = arith.constant 1 : index
    %c0_10 = arith.constant 0 : index
    %c0_11 = arith.constant 0 : index
    %11 = vector.load %arg2[%c1, %c0_10, %c0_11] : memref<9x4x4xbf16, #tpu.memory_space<vmem>>, vector<1x4x4xbf16>
    %12 = vector.shape_cast %11 : vector<1x4x4xbf16> to vector<4x4xbf16>
    %cst_12 = arith.constant dense<0.000000e+00> : vector<64x4xf32>
    %13 = tpu.matmul %10, %12, %cst_12 {dimension_numbers = #tpu.dot_dimension_numbers<[1], [0], [0], [1], [0, 0, 1, 1], [], []>} : vector<64x4xbf16>, vector<4x4xbf16>, vector<64x4xf32> -> vector<64x4xf32>
    %14 = arith.addf %7, %13 : vector<64x4xf32>
    %c0_13 = arith.constant 0 : index
    %c0_14 = arith.constant 0 : index
    %c1_15 = arith.constant 1 : index
    %c0_16 = arith.constant 0 : index
    %15 = vector.load %arg1[%c0_13, %c0_14, %c1_15, %c0_16] : memref<1x36x9x4xbf16, #tpu.memory_space<vmem>>, vector<1x8x8x4xbf16>
    %16 = vector.shape_cast %15 : vector<1x8x8x4xbf16> to vector<8x8x4xbf16>
    %17 = vector.shape_cast %16 : vector<8x8x4xbf16> to vector<64x4xbf16>
    %c2 = arith.constant 2 : index
    %c0_17 = arith.constant 0 : index
    %c0_18 = arith.constant 0 : index
    %18 = vector.load %arg2[%c2, %c0_17, %c0_18] : memref<9x4x4xbf16, #tpu.memory_space<vmem>>, vector<1x4x4xbf16>
    %19 = vector.shape_cast %18 : vector<1x4x4xbf16> to vector<4x4xbf16>
    %cst_19 = arith.constant dense<0.000000e+00> : vector<64x4xf32>
    %20 = tpu.matmul %17, %19, %cst_19 {dimension_numbers = #tpu.dot_dimension_numbers<[1], [0], [0], [1], [0, 0, 1, 1], [], []>} : vector<64x4xbf16>, vector<4x4xbf16>, vector<64x4xf32> -> vector<64x4xf32>
    %21 = arith.addf %14, %20 : vector<64x4xf32>
    %c0_20 = arith.constant 0 : index
    %c18 = arith.constant 18 : index
    %c0_21 = arith.constant 0 : index
    %c0_22 = arith.constant 0 : index
    %22 = vector.load %arg1[%c0_20, %c18, %c0_21, %c0_22] : memref<1x36x9x4xbf16, #tpu.memory_space<vmem>>, vector<1x8x8x4xbf16>
    %23 = vector.shape_cast %22 : vector<1x8x8x4xbf16> to vector<8x8x4xbf16>
    %24 = vector.shape_cast %23 : vector<8x8x4xbf16> to vector<64x4xbf16>
    %c3 = arith.constant 3 : index
    %c0_23 = arith.constant 0 : index
    %c0_24 = arith.constant 0 : index
    %25 = vector.load %arg2[%c3, %c0_23, %c0_24] : memref<9x4x4xbf16, #tpu.memory_space<vmem>>, vector<1x4x4xbf16>
    %26 = vector.shape_cast %25 : vector<1x4x4xbf16> to vector<4x4xbf16>
    %cst_25 = arith.constant dense<0.000000e+00> : vector<64x4xf32>
    %27 = tpu.matmul %24, %26, %cst_25 {dimension_numbers = #tpu.dot_dimension_numbers<[1], [0], [0], [1], [0, 0, 1, 1], [], []>} : vector<64x4xbf16>, vector<4x4xbf16>, vector<64x4xf32> -> vector<64x4xf32>
    %28 = arith.addf %21, %27 : vector<64x4xf32>
    %c0_26 = arith.constant 0 : index
    %c27 = arith.constant 27 : index
    %c0_27 = arith.constant 0 : index
    %c0_28 = arith.constant 0 : index
    %29 = vector.load %arg1[%c0_26, %c27, %c0_27, %c0_28] : memref<1x36x9x4xbf16, #tpu.memory_space<vmem>>, vector<1x8x8x4xbf16>
    %30 = vector.shape_cast %29 : vector<1x8x8x4xbf16> to vector<8x8x4xbf16>
    %31 = vector.shape_cast %30 : vector<8x8x4xbf16> to vector<64x4xbf16>
    %c4 = arith.constant 4 : index
    %c0_29 = arith.constant 0 : index
    %c0_30 = arith.constant 0 : index
    %32 = vector.load %arg2[%c4, %c0_29, %c0_30] : memref<9x4x4xbf16, #tpu.memory_space<vmem>>, vector<1x4x4xbf16>
    %33 = vector.shape_cast %32 : vector<1x4x4xbf16> to vector<4x4xbf16>
    %cst_31 = arith.constant dense<0.000000e+00> : vector<64x4xf32>
    %34 = tpu.matmul %31, %33, %cst_31 {dimension_numbers = #tpu.dot_dimension_numbers<[1], [0], [0], [1], [0, 0, 1, 1], [], []>} : vector<64x4xbf16>, vector<4x4xbf16>, vector<64x4xf32> -> vector<64x4xf32>
    %35 = arith.addf %28, %34 : vector<64x4xf32>
    %c0_32 = arith.constant 0 : index
    %c18_33 = arith.constant 18 : index
    %c1_34 = arith.constant 1 : index
    %c0_35 = arith.constant 0 : index
    %36 = vector.load %arg1[%c0_32, %c18_33, %c1_34, %c0_35] : memref<1x36x9x4xbf16, #tpu.memory_space<vmem>>, vector<1x8x8x4xbf16>
    %37 = vector.shape_cast %36 : vector<1x8x8x4xbf16> to vector<8x8x4xbf16>
    %38 = vector.shape_cast %37 : vector<8x8x4xbf16> to vector<64x4xbf16>
    %c5 = arith.constant 5 : index
    %c0_36 = arith.constant 0 : index
    %c0_37 = arith.constant 0 : index
    %39 = vector.load %arg2[%c5, %c0_36, %c0_37] : memref<9x4x4xbf16, #tpu.memory_space<vmem>>, vector<1x4x4xbf16>
    %40 = vector.shape_cast %39 : vector<1x4x4xbf16> to vector<4x4xbf16>
    %cst_38 = arith.constant dense<0.000000e+00> : vector<64x4xf32>
    %41 = tpu.matmul %38, %40, %cst_38 {dimension_numbers = #tpu.dot_dimension_numbers<[1], [0], [0], [1], [0, 0, 1, 1], [], []>} : vector<64x4xbf16>, vector<4x4xbf16>, vector<64x4xf32> -> vector<64x4xf32>
    %42 = arith.addf %35, %41 : vector<64x4xf32>
    %c0_39 = arith.constant 0 : index
    %c1_40 = arith.constant 1 : index
    %c0_41 = arith.constant 0 : index
    %c0_42 = arith.constant 0 : index
    %43 = vector.load %arg1[%c0_39, %c1_40, %c0_41, %c0_42] : memref<1x36x9x4xbf16, #tpu.memory_space<vmem>>, vector<1x8x8x4xbf16>
    %44 = vector.shape_cast %43 : vector<1x8x8x4xbf16> to vector<8x8x4xbf16>
    %45 = vector.shape_cast %44 : vector<8x8x4xbf16> to vector<64x4xbf16>
    %c6 = arith.constant 6 : index
    %c0_43 = arith.constant 0 : index
    %c0_44 = arith.constant 0 : index
    %46 = vector.load %arg2[%c6, %c0_43, %c0_44] : memref<9x4x4xbf16, #tpu.memory_space<vmem>>, vector<1x4x4xbf16>
    %47 = vector.shape_cast %46 : vector<1x4x4xbf16> to vector<4x4xbf16>
    %cst_45 = arith.constant dense<0.000000e+00> : vector<64x4xf32>
    %48 = tpu.matmul %45, %47, %cst_45 {dimension_numbers = #tpu.dot_dimension_numbers<[1], [0], [0], [1], [0, 0, 1, 1], [], []>} : vector<64x4xbf16>, vector<4x4xbf16>, vector<64x4xf32> -> vector<64x4xf32>
    %49 = arith.addf %42, %48 : vector<64x4xf32>
    %c0_46 = arith.constant 0 : index
    %c10 = arith.constant 10 : index
    %c0_47 = arith.constant 0 : index
    %c0_48 = arith.constant 0 : index
    %50 = vector.load %arg1[%c0_46, %c10, %c0_47, %c0_48] : memref<1x36x9x4xbf16, #tpu.memory_space<vmem>>, vector<1x8x8x4xbf16>
    %51 = vector.shape_cast %50 : vector<1x8x8x4xbf16> to vector<8x8x4xbf16>
    %52 = vector.shape_cast %51 : vector<8x8x4xbf16> to vector<64x4xbf16>
    %c7 = arith.constant 7 : index
    %c0_49 = arith.constant 0 : index
    %c0_50 = arith.constant 0 : index
    %53 = vector.load %arg2[%c7, %c0_49, %c0_50] : memref<9x4x4xbf16, #tpu.memory_space<vmem>>, vector<1x4x4xbf16>
    %54 = vector.shape_cast %53 : vector<1x4x4xbf16> to vector<4x4xbf16>
    %cst_51 = arith.constant dense<0.000000e+00> : vector<64x4xf32>
    %55 = tpu.matmul %52, %54, %cst_51 {dimension_numbers = #tpu.dot_dimension_numbers<[1], [0], [0], [1], [0, 0, 1, 1], [], []>} : vector<64x4xbf16>, vector<4x4xbf16>, vector<64x4xf32> -> vector<64x4xf32>
    %56 = arith.addf %49, %55 : vector<64x4xf32>
    %c0_52 = arith.constant 0 : index
    %c1_53 = arith.constant 1 : index
    %c1_54 = arith.constant 1 : index
    %c0_55 = arith.constant 0 : index
    %57 = vector.load %arg1[%c0_52, %c1_53, %c1_54, %c0_55] : memref<1x36x9x4xbf16, #tpu.memory_space<vmem>>, vector<1x8x8x4xbf16>
    %58 = vector.shape_cast %57 : vector<1x8x8x4xbf16> to vector<8x8x4xbf16>
    %59 = vector.shape_cast %58 : vector<8x8x4xbf16> to vector<64x4xbf16>
    %c8 = arith.constant 8 : index
    %c0_56 = arith.constant 0 : index
    %c0_57 = arith.constant 0 : index
    %60 = vector.load %arg2[%c8, %c0_56, %c0_57] : memref<9x4x4xbf16, #tpu.memory_space<vmem>>, vector<1x4x4xbf16>
    %61 = vector.shape_cast %60 : vector<1x4x4xbf16> to vector<4x4xbf16>
    %cst_58 = arith.constant dense<0.000000e+00> : vector<64x4xf32>
    %62 = tpu.matmul %59, %61, %cst_58 {dimension_numbers = #tpu.dot_dimension_numbers<[1], [0], [0], [1], [0, 0, 1, 1], [], []>} : vector<64x4xbf16>, vector<4x4xbf16>, vector<64x4xf32> -> vector<64x4xf32>
    %63 = arith.addf %56, %62 : vector<64x4xf32>
    %c0_59 = arith.constant 0 : index
    %c0_60 = arith.constant 0 : index
    %64 = vector.load %arg3[%c0_59, %c0_60] : memref<2x4xf32, #tpu.memory_space<vmem>>, vector<1x4xf32>
    %65 = vector.broadcast %64 : vector<1x4xf32> to vector<64x4xf32>
    %66 = arith.mulf %63, %65 : vector<64x4xf32>
    %c1_61 = arith.constant 1 : index
    %c0_62 = arith.constant 0 : index
    %67 = vector.load %arg3[%c1_61, %c0_62] : memref<2x4xf32, #tpu.memory_space<vmem>>, vector<1x4xf32>
    %68 = vector.broadcast %67 : vector<1x4xf32> to vector<64x4xf32>
    %69 = arith.addf %66, %68 : vector<64x4xf32>
    %cst_63 = arith.constant 0.000000e+00 : f32
    %70 = vector.broadcast %cst_63 : f32 to vector<64x4xf32>
    %71 = arith.maximumf %69, %70 : vector<64x4xf32>
    %72 = vector.shape_cast %71 : vector<64x4xf32> to vector<1x64x4xf32>
    %73 = arith.truncf %72 : vector<1x64x4xf32> to vector<1x64x4xbf16>
    %c0_64 = arith.constant 0 : index
    %c0_65 = arith.constant 0 : index
    %c0_66 = arith.constant 0 : index
    %74 = vector.load %arg4[%c0_64, %c0_65, %c0_66] : memref<1x64x4xbf16, #tpu.memory_space<vmem>>, vector<1x64x4xbf16>
    tpu.vector_store %arg4[%c0_64, %c0_65, %c0_66], %73 {strides = array<i32>} : memref<1x64x4xbf16, #tpu.memory_space<vmem>>, vector<1x64x4xbf16>,
    return
  }
  func.func @transform_0(%arg0: i32) -> (i32, i32, i32, i32) {
    %c0_i32 = arith.constant 0 : i32
    %c0_i32_0 = arith.constant 0 : i32
    %c0_i32_1 = arith.constant 0 : i32
    %c0_i32_2 = arith.constant 0 : i32
    return %arg0, %c0_i32, %c0_i32_0, %c0_i32_1 : i32, i32, i32, i32
  }
  func.func @transform_1(%arg0: i32) -> (i32, i32, i32) {
    %c0_i32 = arith.constant 0 : i32
    %c0_i32_0 = arith.constant 0 : i32
    %c0_i32_1 = arith.constant 0 : i32
    %c0_i32_2 = arith.constant 0 : i32
    return %c0_i32, %c0_i32_0, %c0_i32_1 : i32, i32, i32
  }
  func.func @transform_2(%arg0: i32) -> (i32, i32) {
    %c0_i32 = arith.constant 0 : i32
    %c0_i32_0 = arith.constant 0 : i32
    %c0_i32_1 = arith.constant 0 : i32
    return %c0_i32, %c0_i32_0 : i32, i32
  }
  func.func @transform_3(%arg0: i32) -> (i32, i32, i32) {
    %c0_i32 = arith.constant 0 : i32
    %c0_i32_0 = arith.constant 0 : i32
    %c0_i32_1 = arith.constant 0 : i32
    return %arg0, %c0_i32, %c0_i32_0 : i32, i32, i32
  }
}

module attributes {stable_mosaic.version = 11 : i64} {
  func.func @_mm_bn_add_relu_kernel(%arg0: i32, %arg1: i32, %arg2: memref<128x4xbf16, #tpu.memory_space<vmem>>, %arg3: memref<4x16xbf16, #tpu.memory_space<vmem>>, %arg4: memref<2x16xf32, #tpu.memory_space<vmem>>, %arg5: memref<128x16xbf16, #tpu.memory_space<vmem>>, %arg6: memref<128x16xf32, #tpu.memory_space<vmem>>) attributes {dimension_semantics = [#tpu.dimension_semantics<parallel>, #tpu.dimension_semantics<parallel>], iteration_bounds = array<i64: 1, 1>, scalar_prefetch = 0 : i64, scratch_operands = 0 : i64, tpu.core_type = #tpu.core_type<tc>, window_params = [{transform_indices = @transform_0, window_bounds = array<i64: 128, 4>}, {transform_indices = @transform_1, window_bounds = array<i64: 4, 16>}, {transform_indices = @transform_2, window_bounds = array<i64: 2, 16>}, {transform_indices = @transform_3, window_bounds = array<i64: 128, 16>}, {transform_indices = @transform_4, window_bounds = array<i64: 128, 16>}]} {
    %c0 = arith.constant 0 : index
    %c0_0 = arith.constant 0 : index
    %0 = vector.load %arg2[%c0, %c0_0] : memref<128x4xbf16, #tpu.memory_space<vmem>>, vector<128x4xbf16>
    %c0_1 = arith.constant 0 : index
    %c0_2 = arith.constant 0 : index
    %1 = vector.load %arg3[%c0_1, %c0_2] : memref<4x16xbf16, #tpu.memory_space<vmem>>, vector<4x16xbf16>
    %cst = arith.constant dense<0.000000e+00> : vector<128x16xf32>
    %2 = tpu.matmul %0, %1, %cst {dimension_numbers = #tpu.dot_dimension_numbers<[1], [0], [0], [1], [0, 0, 1, 1], [], []>} : vector<128x4xbf16>, vector<4x16xbf16>, vector<128x16xf32> -> vector<128x16xf32>
    %c0_3 = arith.constant 0 : index
    %c0_4 = arith.constant 0 : index
    %3 = vector.load %arg4[%c0_3, %c0_4] : memref<2x16xf32, #tpu.memory_space<vmem>>, vector<1x16xf32>
    %4 = vector.broadcast %3 : vector<1x16xf32> to vector<128x16xf32>
    %5 = arith.mulf %2, %4 : vector<128x16xf32>
    %c1 = arith.constant 1 : index
    %c0_5 = arith.constant 0 : index
    %6 = vector.load %arg4[%c1, %c0_5] : memref<2x16xf32, #tpu.memory_space<vmem>>, vector<1x16xf32>
    %7 = vector.broadcast %6 : vector<1x16xf32> to vector<128x16xf32>
    %8 = arith.addf %5, %7 : vector<128x16xf32>
    %c0_6 = arith.constant 0 : index
    %c0_7 = arith.constant 0 : index
    %9 = vector.load %arg5[%c0_6, %c0_7] : memref<128x16xbf16, #tpu.memory_space<vmem>>, vector<128x16xbf16>
    %10 = arith.extf %9 : vector<128x16xbf16> to vector<128x16xf32>
    %11 = arith.addf %8, %10 : vector<128x16xf32>
    %cst_8 = arith.constant 0.000000e+00 : f32
    %12 = vector.broadcast %cst_8 : f32 to vector<128x16xf32>
    %13 = arith.maximumf %11, %12 : vector<128x16xf32>
    %c0_9 = arith.constant 0 : index
    %c0_10 = arith.constant 0 : index
    %14 = vector.load %arg6[%c0_9, %c0_10] : memref<128x16xf32, #tpu.memory_space<vmem>>, vector<128x16xf32>
    tpu.vector_store %arg6[%c0_9, %c0_10], %13 {strides = array<i32>} : memref<128x16xf32, #tpu.memory_space<vmem>>, vector<128x16xf32>,
    return
  }
  func.func @transform_0(%arg0: i32, %arg1: i32) -> (i32, i32) {
    %c0_i32 = arith.constant 0 : i32
    %c0_i32_0 = arith.constant 0 : i32
    return %arg0, %c0_i32 : i32, i32
  }
  func.func @transform_1(%arg0: i32, %arg1: i32) -> (i32, i32) {
    %c0_i32 = arith.constant 0 : i32
    %c0_i32_0 = arith.constant 0 : i32
    return %c0_i32, %arg1 : i32, i32
  }
  func.func @transform_2(%arg0: i32, %arg1: i32) -> (i32, i32) {
    %c0_i32 = arith.constant 0 : i32
    %c0_i32_0 = arith.constant 0 : i32
    return %c0_i32, %arg1 : i32, i32
  }
  func.func @transform_3(%arg0: i32, %arg1: i32) -> (i32, i32) {
    %c0_i32 = arith.constant 0 : i32
    return %arg0, %arg1 : i32, i32
  }
  func.func @transform_4(%arg0: i32, %arg1: i32) -> (i32, i32) {
    %c0_i32 = arith.constant 0 : i32
    return %arg0, %arg1 : i32, i32
  }
}

module attributes {stable_mosaic.version = 11 : i64} {
  func.func @_mm_bn_kernel(%arg0: i32, %arg1: i32, %arg2: memref<128x4xbf16, #tpu.memory_space<vmem>>, %arg3: memref<4x16xbf16, #tpu.memory_space<vmem>>, %arg4: memref<2x16xf32, #tpu.memory_space<vmem>>, %arg5: memref<128x16xbf16, #tpu.memory_space<vmem>>) attributes {dimension_semantics = [#tpu.dimension_semantics<parallel>, #tpu.dimension_semantics<parallel>], iteration_bounds = array<i64: 1, 1>, scalar_prefetch = 0 : i64, scratch_operands = 0 : i64, tpu.core_type = #tpu.core_type<tc>, window_params = [{transform_indices = @transform_0, window_bounds = array<i64: 128, 4>}, {transform_indices = @transform_1, window_bounds = array<i64: 4, 16>}, {transform_indices = @transform_2, window_bounds = array<i64: 2, 16>}, {transform_indices = @transform_3, window_bounds = array<i64: 128, 16>}]} {
    %c0 = arith.constant 0 : index
    %c0_0 = arith.constant 0 : index
    %0 = vector.load %arg2[%c0, %c0_0] : memref<128x4xbf16, #tpu.memory_space<vmem>>, vector<128x4xbf16>
    %c0_1 = arith.constant 0 : index
    %c0_2 = arith.constant 0 : index
    %1 = vector.load %arg3[%c0_1, %c0_2] : memref<4x16xbf16, #tpu.memory_space<vmem>>, vector<4x16xbf16>
    %cst = arith.constant dense<0.000000e+00> : vector<128x16xf32>
    %2 = tpu.matmul %0, %1, %cst {dimension_numbers = #tpu.dot_dimension_numbers<[1], [0], [0], [1], [0, 0, 1, 1], [], []>} : vector<128x4xbf16>, vector<4x16xbf16>, vector<128x16xf32> -> vector<128x16xf32>
    %c0_3 = arith.constant 0 : index
    %c0_4 = arith.constant 0 : index
    %3 = vector.load %arg4[%c0_3, %c0_4] : memref<2x16xf32, #tpu.memory_space<vmem>>, vector<1x16xf32>
    %4 = vector.broadcast %3 : vector<1x16xf32> to vector<128x16xf32>
    %5 = arith.mulf %2, %4 : vector<128x16xf32>
    %c1 = arith.constant 1 : index
    %c0_5 = arith.constant 0 : index
    %6 = vector.load %arg4[%c1, %c0_5] : memref<2x16xf32, #tpu.memory_space<vmem>>, vector<1x16xf32>
    %7 = vector.broadcast %6 : vector<1x16xf32> to vector<128x16xf32>
    %8 = arith.addf %5, %7 : vector<128x16xf32>
    %9 = arith.truncf %8 : vector<128x16xf32> to vector<128x16xbf16>
    %c0_6 = arith.constant 0 : index
    %c0_7 = arith.constant 0 : index
    %10 = vector.load %arg5[%c0_6, %c0_7] : memref<128x16xbf16, #tpu.memory_space<vmem>>, vector<128x16xbf16>
    tpu.vector_store %arg5[%c0_6, %c0_7], %9 {strides = array<i32>} : memref<128x16xbf16, #tpu.memory_space<vmem>>, vector<128x16xbf16>,
    return
  }
  func.func @transform_0(%arg0: i32, %arg1: i32) -> (i32, i32) {
    %c0_i32 = arith.constant 0 : i32
    %c0_i32_0 = arith.constant 0 : i32
    return %arg0, %c0_i32 : i32, i32
  }
  func.func @transform_1(%arg0: i32, %arg1: i32) -> (i32, i32) {
    %c0_i32 = arith.constant 0 : i32
    %c0_i32_0 = arith.constant 0 : i32
    return %c0_i32, %arg1 : i32, i32
  }
  func.func @transform_2(%arg0: i32, %arg1: i32) -> (i32, i32) {
    %c0_i32 = arith.constant 0 : i32
    %c0_i32_0 = arith.constant 0 : i32
    return %c0_i32, %arg1 : i32, i32
  }
  func.func @transform_3(%arg0: i32, %arg1: i32) -> (i32, i32) {
    %c0_i32 = arith.constant 0 : i32
    return %arg0, %arg1 : i32, i32
  }
}

</mosaic_0001>

<llo_original>
// kernel: bottleneck_forward.4
$region0: #{bottleneck_forward.4}
  #allocation0 [shape = 'u32[]', space=smem, size = 0x4, offset = 0x4, fixed_abs, tag = 'smem constant byte address 0x4 - core index']
  #allocation1 [shape = 'u32[72,128]{1,0:T(1,128)}', space=vmem, size = 0x9000, scoped, tag = 'internal scratch']
  %s0 = inlined_call_operand.vmem [shape: bf16[512,4], index: 0, kind: input, shape index: {}]
  %s1 = inlined_call_operand.vmem [shape: bf16[4,4], index: 1, kind: input, shape index: {}]
  %s2 = inlined_call_operand.vmem [shape: f32[2,4], index: 2, kind: input, shape index: {}]
  %s3 = inlined_call_operand.vmem [shape: bf16[512,4], index: 3, kind: output, shape index: {}]
  %s4 = sld [smem:[#allocation0]]
  $region22: #{bottleneck_forward.4} parent=0
    _
  %s6 = ssub.s32 1, %s4
  %s7 = scalar_select 0, %s6, %s4
  // Predicated region
  $region2: #{bottleneck_forward.4} parent=0 // pred_check
    _
  $region3: #{bottleneck_forward.4} parent=0 // pred_check_branch
    %9 = sbr.rel (0) target = $region5
  $region4: #{bottleneck_forward.4} parent=0 // pred_region
    _
  $region5: #{bottleneck_forward.4} parent=0 // pred_fallthru
    _
  // Predicated region
  $region6: #{bottleneck_forward.4} parent=0 // pred_check
    _
  $region7: #{bottleneck_forward.4} parent=0 // pred_check_branch
    %11 = sbr.rel (0) target = $region9
  $region8: #{bottleneck_forward.4} parent=0 // pred_region
    _
  $region9: #{bottleneck_forward.4} parent=0 // pred_fallthru
    _
  // Predicated region
  $region10: #{bottleneck_forward.4} parent=0 // pred_check
    _
  $region11: #{bottleneck_forward.4} parent=0 // pred_check_branch
    %13 = sbr.rel (0) target = $region13
  $region12: #{bottleneck_forward.4} parent=0 // pred_region
    _
  $region13: #{bottleneck_forward.4} parent=0 // pred_fallthru
    _
  %v15 = vld [vmem:[%s0] sm:$0xf]
  %v16 = vld [vmem:[%s0 + $0x4] sm:$0xf]
  %v17 = vld [vmem:[%s0 + $0x8] sm:$0xf]
  %v18 = vld [vmem:[%s0 + $0xc] sm:$0xf]
  %v19 = vld [vmem:[%s0 + $0x10] sm:$0xf]
  %v20 = vld [vmem:[%s0 + $0x14] sm:$0xf]
  %v21 = vld [vmem:[%s0 + $0x18] sm:$0xf]
  %v22 = vld [vmem:[%s0 + $0x1c] sm:$0xf]
  %v23 = vld [vmem:[%s0 + $0x20] sm:$0xf]
  %v24 = vld [vmem:[%s0 + $0x24] sm:$0xf]
  %v25 = vld [vmem:[%s0 + $0x28] sm:$0xf]
  %v26 = vld [vmem:[%s0 + $0x2c] sm:$0xf]
  %v27 = vld [vmem:[%s0 + $0x30] sm:$0xf]
  %v28 = vld [vmem:[%s0 + $0x34] sm:$0xf]
  %v29 = vld [vmem:[%s0 + $0x38] sm:$0xf]
  %v30 = vld [vmem:[%s0 + $0x3c] sm:$0xf]
  %v31 = vld [vmem:[%s0 + $0x40] sm:$0xf]
  %v32 = vld [vmem:[%s0 + $0x44] sm:$0xf]
  %v33 = vld [vmem:[%s0 + $0x48] sm:$0xf]
  %v34 = vld [vmem:[%s0 + $0x4c] sm:$0xf]
  %v35 = vld [vmem:[%s0 + $0x50] sm:$0xf]
  %v36 = vld [vmem:[%s0 + $0x54] sm:$0xf]
  %v37 = vld [vmem:[%s0 + $0x58] sm:$0xf]
  %v38 = vld [vmem:[%s0 + $0x5c] sm:$0xf]
  %v39 = vld [vmem:[%s0 + $0x60] sm:$0xf]
  %v40 = vld [vmem:[%s0 + $0x64] sm:$0xf]
  %v41 = vld [vmem:[%s0 + $0x68] sm:$0xf]
  %v42 = vld [vmem:[%s0 + $0x6c] sm:$0xf]
  %v43 = vld [vmem:[%s0 + $0x70] sm:$0xf]
  %v44 = vld [vmem:[%s0 + $0x74] sm:$0xf]
  %v45 = vld [vmem:[%s0 + $0x78] sm:$0xf]
  %v46 = vld [vmem:[%s0 + $0x7c] sm:$0xf]
  %v47 = vld [vmem:[%s0 + $0x80] sm:$0xf]
  %v48 = vld [vmem:[%s0 + $0x84] sm:$0xf]
  %v49 = vld [vmem:[%s0 + $0x88] sm:$0xf]
  %v50 = vld [vmem:[%s0 + $0x8c] sm:$0xf]
  %v51 = vld [vmem:[%s0 + $0x90] sm:$0xf]
  %v52 = vld [vmem:[%s0 + $0x94] sm:$0xf]
  %v53 = vld [vmem:[%s0 + $0x98] sm:$0xf]
  %v54 = vld [vmem:[%s0 + $0x9c] sm:$0xf]
  %v55 = vld [vmem:[%s0 + $0xa0] sm:$0xf]
  %v56 = vld [vmem:[%s0 + $0xa4] sm:$0xf]
  %v57 = vld [vmem:[%s0 + $0xa8] sm:$0xf]
  %v58 = vld [vmem:[%s0 + $0xac] sm:$0xf]
  %v59 = vld [vmem:[%s0 + $0xb0] sm:$0xf]
  %v60 = vld [vmem:[%s0 + $0xb4] sm:$0xf]
  %v61 = vld [vmem:[%s0 + $0xb8] sm:$0xf]
  %v62 = vld [vmem:[%s0 + $0xbc] sm:$0xf]
  %v63 = vld [vmem:[%s0 + $0xc0] sm:$0xf]
  %v64 = vld [vmem:[%s0 + $0xc4] sm:$0xf]
  %v65 = vld [vmem:[%s0 + $0xc8] sm:$0xf]
  %v66 = vld [vmem:[%s0 + $0xcc] sm:$0xf]
  %v67 = vld [vmem:[%s0 + $0xd0] sm:$0xf]
  %v68 = vld [vmem:[%s0 + $0xd4] sm:$0xf]
  %v69 = vld [vmem:[%s0 + $0xd8] sm:$0xf]
  %v70 = vld [vmem:[%s0 + $0xdc] sm:$0xf]
  %v71 = vld [vmem:[%s0 + $0xe0] sm:$0xf]
  %v72 = vld [vmem:[%s0 + $0xe4] sm:$0xf]
  %v73 = vld [vmem:[%s0 + $0xe8] sm:$0xf]
  %v74 = vld [vmem:[%s0 + $0xec] sm:$0xf]
  %v75 = vld [vmem:[%s0 + $0xf0] sm:$0xf]
  %v76 = vld [vmem:[%s0 + $0xf4] sm:$0xf]
  %v77 = vld [vmem:[%s0 + $0xf8] sm:$0xf]
  %v78 = vld [vmem:[%s0 + $0xfc] sm:$0xf]
  %v79 = vld [vmem:[%s1] sm:$0x3]
  %v144 = vunpack.c.l.b16 %v15
  %v145 = vunpack.c.l.b16 %v16
  %v146 = vunpack.c.l.b16 %v17
  %v147 = vunpack.c.l.b16 %v18
  %v148 = vunpack.c.l.b16 %v19
  %v149 = vunpack.c.l.b16 %v20
  %v150 = vunpack.c.l.b16 %v21
  %v151 = vunpack.c.l.b16 %v22
  %v152 = vunpack.c.l.b16 %v23
  %v153 = vunpack.c.l.b16 %v24
  %v154 = vunpack.c.l.b16 %v25
  %v155 = vunpack.c.l.b16 %v26
  %v156 = vunpack.c.l.b16 %v27
  %v157 = vunpack.c.l.b16 %v28
  %v158 = vunpack.c.l.b16 %v29
  %v159 = vunpack.c.l.b16 %v30
  %v160 = vunpack.c.l.b16 %v31
  %v161 = vunpack.c.l.b16 %v32
  %v162 = vunpack.c.l.b16 %v33
  %v163 = vunpack.c.l.b16 %v34
  %v164 = vunpack.c.l.b16 %v35
  %v165 = vunpack.c.l.b16 %v36
  %v166 = vunpack.c.l.b16 %v37
  %v167 = vunpack.c.l.b16 %v38
  %v168 = vunpack.c.l.b16 %v39
  %v169 = vunpack.c.l.b16 %v40
  %v170 = vunpack.c.l.b16 %v41
  %v171 = vunpack.c.l.b16 %v42
  %v172 = vunpack.c.l.b16 %v43
  %v173 = vunpack.c.l.b16 %v44
  %v174 = vunpack.c.l.b16 %v45
  %v175 = vunpack.c.l.b16 %v46
  %v176 = vunpack.c.l.b16 %v47
  %v177 = vunpack.c.l.b16 %v48
  %v178 = vunpack.c.l.b16 %v49
  %v179 = vunpack.c.l.b16 %v50
  %v180 = vunpack.c.l.b16 %v51
  %v181 = vunpack.c.l.b16 %v52
  %v182 = vunpack.c.l.b16 %v53
  %v183 = vunpack.c.l.b16 %v54
  %v184 = vunpack.c.l.b16 %v55
  %v185 = vunpack.c.l.b16 %v56
  %v186 = vunpack.c.l.b16 %v57
  %v187 = vunpack.c.l.b16 %v58
  %v188 = vunpack.c.l.b16 %v59
  %v189 = vunpack.c.l.b16 %v60
  %v190 = vunpack.c.l.b16 %v61
  %v191 = vunpack.c.l.b16 %v62
  %v192 = vunpack.c.l.b16 %v63
  %v193 = vunpack.c.l.b16 %v64
  %v194 = vunpack.c.l.b16 %v65
  %v195 = vunpack.c.l.b16 %v66
  %v196 = vunpack.c.l.b16 %v67
  %v197 = vunpack.c.l.b16 %v68
  %v198 = vunpack.c.l.b16 %v69
  %v199 = vunpack.c.l.b16 %v70
  %v200 = vunpack.c.l.b16 %v71
  %v201 = vunpack.c.l.b16 %v72
  %v202 = vunpack.c.l.b16 %v73
  %v203 = vunpack.c.l.b16 %v74
  %v204 = vunpack.c.l.b16 %v75
  %v205 = vunpack.c.l.b16 %v76
  %v206 = vunpack.c.l.b16 %v77
  %v207 = vunpack.c.l.b16 %v78
  %v208 = vpack.c.b16 %v145, %v144
  %v209 = vpack.c.b16 %v147, %v146
  %v210 = vpack.c.b16 %v149, %v148
  %v211 = vpack.c.b16 %v151, %v150
  %v212 = vpack.c.b16 %v153, %v152
  %v213 = vpack.c.b16 %v155, %v154
  %v214 = vpack.c.b16 %v157, %v156
  %v215 = vpack.c.b16 %v159, %v158
  %v216 = vpack.c.b16 %v161, %v160
  %v217 = vpack.c.b16 %v163, %v162
  %v218 = vpack.c.b16 %v165, %v164
  %v219 = vpack.c.b16 %v167, %v166
  %v220 = vpack.c.b16 %v169, %v168
  %v221 = vpack.c.b16 %v171, %v170
  %v222 = vpack.c.b16 %v173, %v172
  %v223 = vpack.c.b16 %v175, %v174
  %v224 = vpack.c.b16 %v177, %v176
  %v225 = vpack.c.b16 %v179, %v178
  %v226 = vpack.c.b16 %v181, %v180
  %v227 = vpack.c.b16 %v183, %v182
  %v228 = vpack.c.b16 %v185, %v184
  %v229 = vpack.c.b16 %v187, %v186
  %v230 = vpack.c.b16 %v189, %v188
  %v231 = vpack.c.b16 %v191, %v190
  %v232 = vpack.c.b16 %v193, %v192
  %v233 = vpack.c.b16 %v195, %v194
  %v234 = vpack.c.b16 %v197, %v196
  %v235 = vpack.c.b16 %v199, %v198
  %v236 = vpack.c.b16 %v201, %v200
  %v237 = vpack.c.b16 %v203, %v202
  %v238 = vpack.c.b16 %v205, %v204
  %v239 = vpack.c.b16 %v207, %v206
  %vm240 = vcmask 31744
  %v242 = vsel %vm240, %v208, 0
  %v245 = vsel %vm240, %v209, 0
  %v248 = vsel %vm240, %v210, 0
  %v251 = vsel %vm240, %v211, 0
  %v254 = vsel %vm240, %v212, 0
  %v257 = vsel %vm240, %v213, 0
  %v260 = vsel %vm240, %v214, 0
  %v263 = vsel %vm240, %v215, 0
  %v266 = vsel %vm240, %v216, 0
  %v269 = vsel %vm240, %v217, 0
  %v272 = vsel %vm240, %v218, 0
  %v275 = vsel %vm240, %v219, 0
  %v278 = vsel %vm240, %v220, 0
  %v281 = vsel %vm240, %v221, 0
  %v284 = vsel %vm240, %v222, 0
  %v287 = vsel %vm240, %v223, 0
  %v290 = vsel %vm240, %v224, 0
  %v293 = vsel %vm240, %v225, 0
  %v296 = vsel %vm240, %v226, 0
  %v299 = vsel %vm240, %v227, 0
  %v302 = vsel %vm240, %v228, 0
  %v305 = vsel %vm240, %v229, 0
  %v308 = vsel %vm240, %v230, 0
  %v311 = vsel %vm240, %v231, 0
  %v314 = vsel %vm240, %v232, 0
  %v317 = vsel %vm240, %v233, 0
  %v320 = vsel %vm240, %v234, 0
  %v323 = vsel %vm240, %v235, 0
  %v326 = vsel %vm240, %v236, 0
  %v329 = vsel %vm240, %v237, 0
  %v332 = vsel %vm240, %v238, 0
  %v335 = vsel %vm240, %v239, 0
  %vm337 = vcmask 1041408
  %v339 = vsel %vm337, %v79, 0
  %341 = vmatpush.bf16.msra.mxu0 0
  %342 = vmatpush.bf16.msra.mxu0 0
  %343 = vmatpush.bf16.msra.mxu0 0
  %344 = vmatpush.bf16.msra.mxu0 0
  %345 = vmatpush.bf16.msra.mxu0 0
  %346 = vmatpush.bf16.msra.mxu0 0
  %347 = vmatpush.bf16.msra.mxu0 0
  %348 = vmatpush.bf16.msra.mxu0 %v339
  %349 = vmatmul.bf16.gmra.mxu0 %v242
  %v350 = vpop.f32.mrf.mxu0
  %v351 = vadd.f32 0.0, %v350
  %v352 = vpop.f32.mrf.mxu0
  %v353 = vadd.f32 0.0, %v352
  %354 = vmatmul.bf16.gmra.mxu0 %v245
  %v355 = vpop.f32.mrf.mxu0
  %v356 = vadd.f32 0.0, %v355
  %v357 = vpop.f32.mrf.mxu0
  %v358 = vadd.f32 0.0, %v357
  %359 = vmatmul.bf16.gmra.mxu0 %v248
  %v360 = vpop.f32.mrf.mxu0
  %v361 = vadd.f32 0.0, %v360
  %v362 = vpop.f32.mrf.mxu0
  %v363 = vadd.f32 0.0, %v362
  %364 = vmatmul.bf16.gmra.mxu0 %v251
  %v365 = vpop.f32.mrf.mxu0
  %v366 = vadd.f32 0.0, %v365
  %v367 = vpop.f32.mrf.mxu0
  %v368 = vadd.f32 0.0, %v367
  %369 = vmatmul.bf16.gmra.mxu0 %v254
  %v370 = vpop.f32.mrf.mxu0
  %v371 = vadd.f32 0.0, %v370
  %v372 = vpop.f32.mrf.mxu0
  %v373 = vadd.f32 0.0, %v372
  %374 = vmatmul.bf16.gmra.mxu0 %v257
  %v375 = vpop.f32.mrf.mxu0
  %v376 = vadd.f32 0.0, %v375
  %v377 = vpop.f32.mrf.mxu0
  %v378 = vadd.f32 0.0, %v377
  %379 = vmatmul.bf16.gmra.mxu0 %v260
  %v380 = vpop.f32.mrf.mxu0
  %v381 = vadd.f32 0.0, %v380
  %v382 = vpop.f32.mrf.mxu0
  %v383 = vadd.f32 0.0, %v382
  %384 = vmatmul.bf16.gmra.mxu0 %v263
  %v385 = vpop.f32.mrf.mxu0
  %v386 = vadd.f32 0.0, %v385
  %v387 = vpop.f32.mrf.mxu0
  %v388 = vadd.f32 0.0, %v387
  %389 = vmatmul.bf16.gmra.mxu0 %v266
  %v390 = vpop.f32.mrf.mxu0
  %v391 = vadd.f32 0.0, %v390
  %v392 = vpop.f32.mrf.mxu0
  %v393 = vadd.f32 0.0, %v392
  %394 = vmatmul.bf16.gmra.mxu0 %v269
  %v395 = vpop.f32.mrf.mxu0
  %v396 = vadd.f32 0.0, %v395
  %v397 = vpop.f32.mrf.mxu0
  %v398 = vadd.f32 0.0, %v397
  %399 = vmatmul.bf16.gmra.mxu0 %v272
  %v400 = vpop.f32.mrf.mxu0
  %v401 = vadd.f32 0.0, %v400
  %v402 = vpop.f32.mrf.mxu0
  %v403 = vadd.f32 0.0, %v402
  %404 = vmatmul.bf16.gmra.mxu0 %v275
  %v405 = vpop.f32.mrf.mxu0
  %v406 = vadd.f32 0.0, %v405
  %v407 = vpop.f32.mrf.mxu0
  %v408 = vadd.f32 0.0, %v407
  %409 = vmatmul.bf16.gmra.mxu0 %v278
  %v410 = vpop.f32.mrf.mxu0
  %v411 = vadd.f32 0.0, %v410
  %v412 = vpop.f32.mrf.mxu0
  %v413 = vadd.f32 0.0, %v412
  %414 = vmatmul.bf16.gmra.mxu0 %v281
  %v415 = vpop.f32.mrf.mxu0
  %v416 = vadd.f32 0.0, %v415
  %v417 = vpop.f32.mrf.mxu0
  %v418 = vadd.f32 0.0, %v417
  %419 = vmatmul.bf16.gmra.mxu0 %v284
  %v420 = vpop.f32.mrf.mxu0
  %v421 = vadd.f32 0.0, %v420
  %v422 = vpop.f32.mrf.mxu0
  %v423 = vadd.f32 0.0, %v422
  %424 = vmatmul.bf16.gmra.mxu0 %v287
  %v425 = vpop.f32.mrf.mxu0
  %v426 = vadd.f32 0.0, %v425
  %v427 = vpop.f32.mrf.mxu0
  %v428 = vadd.f32 0.0, %v427
  %429 = vmatmul.bf16.gmra.mxu0 %v290
  %v430 = vpop.f32.mrf.mxu0
  %v431 = vadd.f32 0.0, %v430
  %v432 = vpop.f32.mrf.mxu0
  %v433 = vadd.f32 0.0, %v432
  %434 = vmatmul.bf16.gmra.mxu0 %v293
  %v435 = vpop.f32.mrf.mxu0
  %v436 = vadd.f32 0.0, %v435
  %v437 = vpop.f32.mrf.mxu0
  %v438 = vadd.f32 0.0, %v437
  %439 = vmatmul.bf16.gmra.mxu0 %v296
  %v440 = vpop.f32.mrf.mxu0
  %v441 = vadd.f32 0.0, %v440
  %v442 = vpop.f32.mrf.mxu0
  %v443 = vadd.f32 0.0, %v442
  %444 = vmatmul.bf16.gmra.mxu0 %v299
  %v445 = vpop.f32.mrf.mxu0
  %v446 = vadd.f32 0.0, %v445
  %v447 = vpop.f32.mrf.mxu0
  %v448 = vadd.f32 0.0, %v447
  %449 = vmatmul.bf16.gmra.mxu0 %v302
  %v450 = vpop.f32.mrf.mxu0
  %v451 = vadd.f32 0.0, %v450
  %v452 = vpop.f32.mrf.mxu0
  %v453 = vadd.f32 0.0, %v452
  %454 = vmatmul.bf16.gmra.mxu0 %v305
  %v455 = vpop.f32.mrf.mxu0
  %v456 = vadd.f32 0.0, %v455
  %v457 = vpop.f32.mrf.mxu0
  %v458 = vadd.f32 0.0, %v457
  %459 = vmatmul.bf16.gmra.mxu0 %v308
  %v460 = vpop.f32.mrf.mxu0
  %v461 = vadd.f32 0.0, %v460
  %v462 = vpop.f32.mrf.mxu0
  %v463 = vadd.f32 0.0, %v462
  %464 = vmatmul.bf16.gmra.mxu0 %v311
  %v465 = vpop.f32.mrf.mxu0
  %v466 = vadd.f32 0.0, %v465
  %v467 = vpop.f32.mrf.mxu0
  %v468 = vadd.f32 0.0, %v467
  %469 = vmatmul.bf16.gmra.mxu0 %v314
  %v470 = vpop.f32.mrf.mxu0
  %v471 = vadd.f32 0.0, %v470
  %v472 = vpop.f32.mrf.mxu0
  %v473 = vadd.f32 0.0, %v472
  %474 = vmatmul.bf16.gmra.mxu0 %v317
  %v475 = vpop.f32.mrf.mxu0
  %v476 = vadd.f32 0.0, %v475
  %v477 = vpop.f32.mrf.mxu0
  %v478 = vadd.f32 0.0, %v477
  %479 = vmatmul.bf16.gmra.mxu0 %v320
  %v480 = vpop.f32.mrf.mxu0
  %v481 = vadd.f32 0.0, %v480
  %v482 = vpop.f32.mrf.mxu0
  %v483 = vadd.f32 0.0, %v482
  %484 = vmatmul.bf16.gmra.mxu0 %v323
  %v485 = vpop.f32.mrf.mxu0
  %v486 = vadd.f32 0.0, %v485
  %v487 = vpop.f32.mrf.mxu0
  %v488 = vadd.f32 0.0, %v487
  %489 = vmatmul.bf16.gmra.mxu0 %v326
  %v490 = vpop.f32.mrf.mxu0
  %v491 = vadd.f32 0.0, %v490
  %v492 = vpop.f32.mrf.mxu0
  %v493 = vadd.f32 0.0, %v492
  %494 = vmatmul.bf16.gmra.mxu0 %v329
  %v495 = vpop.f32.mrf.mxu0
  %v496 = vadd.f32 0.0, %v495
  %v497 = vpop.f32.mrf.mxu0
  %v498 = vadd.f32 0.0, %v497
  %499 = vmatmul.bf16.gmra.mxu0 %v332
  %v500 = vpop.f32.mrf.mxu0
  %v501 = vadd.f32 0.0, %v500
  %v502 = vpop.f32.mrf.mxu0
  %v503 = vadd.f32 0.0, %v502
  %504 = vmatmul.bf16.gmra.mxu0 %v335
  %v505 = vpop.f32.mrf.mxu0
  %v506 = vadd.f32 0.0, %v505
  %v507 = vpop.f32.mrf.mxu0
  %v508 = vadd.f32 0.0, %v507
  %509 = vdwg.mxu0
  %v510 = vld [vmem:[%s2] sm:$0x1]
  %v511 = vperm.slane %v510, 0
  %v512 = vmul.f32 %v351, %v511
  %v513 = vmul.f32 %v353, %v511
  %v514 = vmul.f32 %v356, %v511
  %v515 = vmul.f32 %v358, %v511
  %v516 = vmul.f32 %v361, %v511
  %v517 = vmul.f32 %v363, %v511
  %v518 = vmul.f32 %v366, %v511
  %v519 = vmul.f32 %v368, %v511
  %v520 = vmul.f32 %v371, %v511
  %v521 = vmul.f32 %v373, %v511
  %v522 = vmul.f32 %v376, %v511
  %v523 = vmul.f32 %v378, %v511
  %v524 = vmul.f32 %v381, %v511
  %v525 = vmul.f32 %v383, %v511
  %v526 = vmul.f32 %v386, %v511
  %v527 = vmul.f32 %v388, %v511
  %v528 = vmul.f32 %v391, %v511
  %v529 = vmul.f32 %v393, %v511
  %v530 = vmul.f32 %v396, %v511
  %v531 = vmul.f32 %v398, %v511
  %v532 = vmul.f32 %v401, %v511
  %v533 = vmul.f32 %v403, %v511
  %v534 = vmul.f32 %v406, %v511
  %v535 = vmul.f32 %v408, %v511
  %v536 = vmul.f32 %v411, %v511
  %v537 = vmul.f32 %v413, %v511
  %v538 = vmul.f32 %v416, %v511
  %v539 = vmul.f32 %v418, %v511
  %v540 = vmul.f32 %v421, %v511
  %v541 = vmul.f32 %v423, %v511
  %v542 = vmul.f32 %v426, %v511
  %v543 = vmul.f32 %v428, %v511
  %v544 = vmul.f32 %v431, %v511
  %v545 = vmul.f32 %v433, %v511
  %v546 = vmul.f32 %v436, %v511
  %v547 = vmul.f32 %v438, %v511
  %v548 = vmul.f32 %v441, %v511
  %v549 = vmul.f32 %v443, %v511
  %v550 = vmul.f32 %v446, %v511
  %v551 = vmul.f32 %v448, %v511
  %v552 = vmul.f32 %v451, %v511
  %v553 = vmul.f32 %v453, %v511
  %v554 = vmul.f32 %v456, %v511
  %v555 = vmul.f32 %v458, %v511
  %v556 = vmul.f32 %v461, %v511
  %v557 = vmul.f32 %v463, %v511
  %v558 = vmul.f32 %v466, %v511
  %v559 = vmul.f32 %v468, %v511
  %v560 = vmul.f32 %v471, %v511
  %v561 = vmul.f32 %v473, %v511
  %v562 = vmul.f32 %v476, %v511
  %v563 = vmul.f32 %v478, %v511
  %v564 = vmul.f32 %v481, %v511
  %v565 = vmul.f32 %v483, %v511
  %v566 = vmul.f32 %v486, %v511
  %v567 = vmul.f32 %v488, %v511
  %v568 = vmul.f32 %v491, %v511
  %v569 = vmul.f32 %v493, %v511
  %v570 = vmul.f32 %v496, %v511
  %v571 = vmul.f32 %v498, %v511
  %v572 = vmul.f32 %v501, %v511
  %v573 = vmul.f32 %v503, %v511
  %v574 = vmul.f32 %v506, %v511
  %v575 = vmul.f32 %v508, %v511
  %v576 = vld [vmem:[%s2 + $0x1] sm:$0x1]
  %v577 = vperm.slane %v576, 0
  %v578 = vadd.f32 %v512, %v577
  %v579 = vadd.f32 %v513, %v577
  %v580 = vadd.f32 %v514, %v577
  %v581 = vadd.f32 %v515, %v577
  %v582 = vadd.f32 %v516, %v577
  %v583 = vadd.f32 %v517, %v577
  %v584 = vadd.f32 %v518, %v577
  %v585 = vadd.f32 %v519, %v577
  %v586 = vadd.f32 %v520, %v577
  %v587 = vadd.f32 %v521, %v577
  %v588 = vadd.f32 %v522, %v577
  %v589 = vadd.f32 %v523, %v577
  %v590 = vadd.f32 %v524, %v577
  %v591 = vadd.f32 %v525, %v577
  %v592 = vadd.f32 %v526, %v577
  %v593 = vadd.f32 %v527, %v577
  %v594 = vadd.f32 %v528, %v577
  %v595 = vadd.f32 %v529, %v577
  %v596 = vadd.f32 %v530, %v577
  %v597 = vadd.f32 %v531, %v577
  %v598 = vadd.f32 %v532, %v577
  %v599 = vadd.f32 %v533, %v577
  %v600 = vadd.f32 %v534, %v577
  %v601 = vadd.f32 %v535, %v577
  %v602 = vadd.f32 %v536, %v577
  %v603 = vadd.f32 %v537, %v577
  %v604 = vadd.f32 %v538, %v577
  %v605 = vadd.f32 %v539, %v577
  %v606 = vadd.f32 %v540, %v577
  %v607 = vadd.f32 %v541, %v577
  %v608 = vadd.f32 %v542, %v577
  %v609 = vadd.f32 %v543, %v577
  %v610 = vadd.f32 %v544, %v577
  %v611 = vadd.f32 %v545, %v577
  %v612 = vadd.f32 %v546, %v577
  %v613 = vadd.f32 %v547, %v577
  %v614 = vadd.f32 %v548, %v577
  %v615 = vadd.f32 %v549, %v577
  %v616 = vadd.f32 %v550, %v577
  %v617 = vadd.f32 %v551, %v577
  %v618 = vadd.f32 %v552, %v577
  %v619 = vadd.f32 %v553, %v577
  %v620 = vadd.f32 %v554, %v577
  %v621 = vadd.f32 %v555, %v577
  %v622 = vadd.f32 %v556, %v577
  %v623 = vadd.f32 %v557, %v577
  %v624 = vadd.f32 %v558, %v577
  %v625 = vadd.f32 %v559, %v577
  %v626 = vadd.f32 %v560, %v577
  %v627 = vadd.f32 %v561, %v577
  %v628 = vadd.f32 %v562, %v577
  %v629 = vadd.f32 %v563, %v577
  %v630 = vadd.f32 %v564, %v577
  %v631 = vadd.f32 %v565, %v577
  %v632 = vadd.f32 %v566, %v577
  %v633 = vadd.f32 %v567, %v577
  %v634 = vadd.f32 %v568, %v577
  %v635 = vadd.f32 %v569, %v577
  %v636 = vadd.f32 %v570, %v577
  %v637 = vadd.f32 %v571, %v577
  %v638 = vadd.f32 %v572, %v577
  %v639 = vadd.f32 %v573, %v577
  %v640 = vadd.f32 %v574, %v577
  %v641 = vadd.f32 %v575, %v577
  %v642 = vmax.f32 %v578, 0.0
  %v643 = vmax.f32 %v579, 0.0
  %v644 = vmax.f32 %v580, 0.0
  %v645 = vmax.f32 %v581, 0.0
  %v646 = vmax.f32 %v582, 0.0
  %v647 = vmax.f32 %v583, 0.0
  %v648 = vmax.f32 %v584, 0.0
  %v649 = vmax.f32 %v585, 0.0
  %v650 = vmax.f32 %v586, 0.0
  %v651 = vmax.f32 %v587, 0.0
  %v652 = vmax.f32 %v588, 0.0
  %v653 = vmax.f32 %v589, 0.0
  %v654 = vmax.f32 %v590, 0.0
  %v655 = vmax.f32 %v591, 0.0
  %v656 = vmax.f32 %v592, 0.0
  %v657 = vmax.f32 %v593, 0.0
  %v658 = vmax.f32 %v594, 0.0
  %v659 = vmax.f32 %v595, 0.0
  %v660 = vmax.f32 %v596, 0.0
  %v661 = vmax.f32 %v597, 0.0
  %v662 = vmax.f32 %v598, 0.0
  %v663 = vmax.f32 %v599, 0.0
  %v664 = vmax.f32 %v600, 0.0
  %v665 = vmax.f32 %v601, 0.0
  %v666 = vmax.f32 %v602, 0.0
  %v667 = vmax.f32 %v603, 0.0
  %v668 = vmax.f32 %v604, 0.0
  %v669 = vmax.f32 %v605, 0.0
  %v670 = vmax.f32 %v606, 0.0
  %v671 = vmax.f32 %v607, 0.0
  %v672 = vmax.f32 %v608, 0.0
  %v673 = vmax.f32 %v609, 0.0
  %v674 = vmax.f32 %v610, 0.0
  %v675 = vmax.f32 %v611, 0.0
  %v676 = vmax.f32 %v612, 0.0
  %v677 = vmax.f32 %v613, 0.0
  %v678 = vmax.f32 %v614, 0.0
  %v679 = vmax.f32 %v615, 0.0
  %v680 = vmax.f32 %v616, 0.0
  %v681 = vmax.f32 %v617, 0.0
  %v682 = vmax.f32 %v618, 0.0
  %v683 = vmax.f32 %v619, 0.0
  %v684 = vmax.f32 %v620, 0.0
  %v685 = vmax.f32 %v621, 0.0
  %v686 = vmax.f32 %v622, 0.0
  %v687 = vmax.f32 %v623, 0.0
  %v688 = vmax.f32 %v624, 0.0
  %v689 = vmax.f32 %v625, 0.0
  %v690 = vmax.f32 %v626, 0.0
  %v691 = vmax.f32 %v627, 0.0
  %v692 = vmax.f32 %v628, 0.0
  %v693 = vmax.f32 %v629, 0.0
  %v694 = vmax.f32 %v630, 0.0
  %v695 = vmax.f32 %v631, 0.0
  %v696 = vmax.f32 %v632, 0.0
  %v697 = vmax.f32 %v633, 0.0
  %v698 = vmax.f32 %v634, 0.0
  %v699 = vmax.f32 %v635, 0.0
  %v700 = vmax.f32 %v636, 0.0
  %v701 = vmax.f32 %v637, 0.0
  %v702 = vmax.f32 %v638, 0.0
  %v703 = vmax.f32 %v639, 0.0
  %v704 = vmax.f32 %v640, 0.0
  %v705 = vmax.f32 %v641, 0.0
  %v706 = vpack.c.bf16 %v642, %v642
  %v707 = vpack.c.bf16 %v643, %v643
  %v708 = vpack.c.bf16 %v644, %v644
  %v709 = vpack.c.bf16 %v645, %v645
  %v710 = vpack.c.bf16 %v646, %v646
  %v711 = vpack.c.bf16 %v647, %v647
  %v712 = vpack.c.bf16 %v648, %v648
  %v713 = vpack.c.bf16 %v649, %v649
  %v714 = vpack.c.bf16 %v650, %v650
  %v715 = vpack.c.bf16 %v651, %v651
  %v716 = vpack.c.bf16 %v652, %v652
  %v717 = vpack.c.bf16 %v653, %v653
  %v718 = vpack.c.bf16 %v654, %v654
  %v719 = vpack.c.bf16 %v655, %v655
  %v720 = vpack.c.bf16 %v656, %v656
  %v721 = vpack.c.bf16 %v657, %v657
  %v722 = vpack.c.bf16 %v658, %v658
  %v723 = vpack.c.bf16 %v659, %v659
  %v724 = vpack.c.bf16 %v660, %v660
  %v725 = vpack.c.bf16 %v661, %v661
  %v726 = vpack.c.bf16 %v662, %v662
  %v727 = vpack.c.bf16 %v663, %v663
  %v728 = vpack.c.bf16 %v664, %v664
  %v729 = vpack.c.bf16 %v665, %v665
  %v730 = vpack.c.bf16 %v666, %v666
  %v731 = vpack.c.bf16 %v667, %v667
  %v732 = vpack.c.bf16 %v668, %v668
  %v733 = vpack.c.bf16 %v669, %v669
  %v734 = vpack.c.bf16 %v670, %v670
  %v735 = vpack.c.bf16 %v671, %v671
  %v736 = vpack.c.bf16 %v672, %v672
  %v737 = vpack.c.bf16 %v673, %v673
  %v738 = vpack.c.bf16 %v674, %v674
  %v739 = vpack.c.bf16 %v675, %v675
  %v740 = vpack.c.bf16 %v676, %v676
  %v741 = vpack.c.bf16 %v677, %v677
  %v742 = vpack.c.bf16 %v678, %v678
  %v743 = vpack.c.bf16 %v679, %v679
  %v744 = vpack.c.bf16 %v680, %v680
  %v745 = vpack.c.bf16 %v681, %v681
  %v746 = vpack.c.bf16 %v682, %v682
  %v747 = vpack.c.bf16 %v683, %v683
  %v748 = vpack.c.bf16 %v684, %v684
  %v749 = vpack.c.bf16 %v685, %v685
  %v750 = vpack.c.bf16 %v686, %v686
  %v751 = vpack.c.bf16 %v687, %v687
  %v752 = vpack.c.bf16 %v688, %v688
  %v753 = vpack.c.bf16 %v689, %v689
  %v754 = vpack.c.bf16 %v690, %v690
  %v755 = vpack.c.bf16 %v691, %v691
  %v756 = vpack.c.bf16 %v692, %v692
  %v757 = vpack.c.bf16 %v693, %v693
  %v758 = vpack.c.bf16 %v694, %v694
  %v759 = vpack.c.bf16 %v695, %v695
  %v760 = vpack.c.bf16 %v696, %v696
  %v761 = vpack.c.bf16 %v697, %v697
  %v762 = vpack.c.bf16 %v698, %v698
  %v763 = vpack.c.bf16 %v699, %v699
  %v764 = vpack.c.bf16 %v700, %v700
  %v765 = vpack.c.bf16 %v701, %v701
  %v766 = vpack.c.bf16 %v702, %v702
  %v767 = vpack.c.bf16 %v703, %v703
  %v768 = vpack.c.bf16 %v704, %v704
  %v769 = vpack.c.bf16 %v705, %v705
  %vm770 = vcmask 27648
  %771 = vst.msk [vmem:[%s3] sm:$0xf] %vm770, %v706
  %772 = vst.msk [vmem:[%s3 + $0x4] sm:$0xf] %vm770, %v707
  %773 = vst.msk [vmem:[%s3 + $0x8] sm:$0xf] %vm770, %v708
  %774 = vst.msk [vmem:[%s3 + $0xc] sm:$0xf] %vm770, %v709
  %775 = vst.msk [vmem:[%s3 + $0x10] sm:$0xf] %vm770, %v710
  %776 = vst.msk [vmem:[%s3 + $0x14] sm:$0xf] %vm770, %v711
  %777 = vst.msk [vmem:[%s3 + $0x18] sm:$0xf] %vm770, %v712
  %778 = vst.msk [vmem:[%s3 + $0x1c] sm:$0xf] %vm770, %v713
  %779 = vst.msk [vmem:[%s3 + $0x20] sm:$0xf] %vm770, %v714
  %780 = vst.msk [vmem:[%s3 + $0x24] sm:$0xf] %vm770, %v715
  %781 = vst.msk [vmem:[%s3 + $0x28] sm:$0xf] %vm770, %v716
  %782 = vst.msk [vmem:[%s3 + $0x2c] sm:$0xf] %vm770, %v717
  %783 = vst.msk [vmem:[%s3 + $0x30] sm:$0xf] %vm770, %v718
  %784 = vst.msk [vmem:[%s3 + $0x34] sm:$0xf] %vm770, %v719
  %785 = vst.msk [vmem:[%s3 + $0x38] sm:$0xf] %vm770, %v720
  %786 = vst.msk [vmem:[%s3 + $0x3c] sm:$0xf] %vm770, %v721
  %787 = vst.msk [vmem:[%s3 + $0x40] sm:$0xf] %vm770, %v722
  %788 = vst.msk [vmem:[%s3 + $0x44] sm:$0xf] %vm770, %v723
  %789 = vst.msk [vmem:[%s3 + $0x48] sm:$0xf] %vm770, %v724
  %790 = vst.msk [vmem:[%s3 + $0x4c] sm:$0xf] %vm770, %v725
  %791 = vst.msk [vmem:[%s3 + $0x50] sm:$0xf] %vm770, %v726
  %792 = vst.msk [vmem:[%s3 + $0x54] sm:$0xf] %vm770, %v727
  %793 = vst.msk [vmem:[%s3 + $0x58] sm:$0xf] %vm770, %v728
  %794 = vst.msk [vmem:[%s3 + $0x5c] sm:$0xf] %vm770, %v729
  %795 = vst.msk [vmem:[%s3 + $0x60] sm:$0xf] %vm770, %v730
  %796 = vst.msk [vmem:[%s3 + $0x64] sm:$0xf] %vm770, %v731
  %797 = vst.msk [vmem:[%s3 + $0x68] sm:$0xf] %vm770, %v732
  %798 = vst.msk [vmem:[%s3 + $0x6c] sm:$0xf] %vm770, %v733
  %799 = vst.msk [vmem:[%s3 + $0x70] sm:$0xf] %vm770, %v734
  %800 = vst.msk [vmem:[%s3 + $0x74] sm:$0xf] %vm770, %v735
  %801 = vst.msk [vmem:[%s3 + $0x78] sm:$0xf] %vm770, %v736
  %802 = vst.msk [vmem:[%s3 + $0x7c] sm:$0xf] %vm770, %v737
  %803 = vst.msk [vmem:[%s3 + $0x80] sm:$0xf] %vm770, %v738
  %804 = vst.msk [vmem:[%s3 + $0x84] sm:$0xf] %vm770, %v739
  %805 = vst.msk [vmem:[%s3 + $0x88] sm:$0xf] %vm770, %v740
  %806 = vst.msk [vmem:[%s3 + $0x8c] sm:$0xf] %vm770, %v741
  %807 = vst.msk [vmem:[%s3 + $0x90] sm:$0xf] %vm770, %v742
  %808 = vst.msk [vmem:[%s3 + $0x94] sm:$0xf] %vm770, %v743
  %809 = vst.msk [vmem:[%s3 + $0x98] sm:$0xf] %vm770, %v744
  %810 = vst.msk [vmem:[%s3 + $0x9c] sm:$0xf] %vm770, %v745
  %811 = vst.msk [vmem:[%s3 + $0xa0] sm:$0xf] %vm770, %v746
  %812 = vst.msk [vmem:[%s3 + $0xa4] sm:$0xf] %vm770, %v747
  %813 = vst.msk [vmem:[%s3 + $0xa8] sm:$0xf] %vm770, %v748
  %814 = vst.msk [vmem:[%s3 + $0xac] sm:$0xf] %vm770, %v749
  %815 = vst.msk [vmem:[%s3 + $0xb0] sm:$0xf] %vm770, %v750
  %816 = vst.msk [vmem:[%s3 + $0xb4] sm:$0xf] %vm770, %v751
  %817 = vst.msk [vmem:[%s3 + $0xb8] sm:$0xf] %vm770, %v752
  %818 = vst.msk [vmem:[%s3 + $0xbc] sm:$0xf] %vm770, %v753
  %819 = vst.msk [vmem:[%s3 + $0xc0] sm:$0xf] %vm770, %v754
  %820 = vst.msk [vmem:[%s3 + $0xc4] sm:$0xf] %vm770, %v755
  %821 = vst.msk [vmem:[%s3 + $0xc8] sm:$0xf] %vm770, %v756
  %822 = vst.msk [vmem:[%s3 + $0xcc] sm:$0xf] %vm770, %v757
  %823 = vst.msk [vmem:[%s3 + $0xd0] sm:$0xf] %vm770, %v758
  %824 = vst.msk [vmem:[%s3 + $0xd4] sm:$0xf] %vm770, %v759
  %825 = vst.msk [vmem:[%s3 + $0xd8] sm:$0xf] %vm770, %v760
  %826 = vst.msk [vmem:[%s3 + $0xdc] sm:$0xf] %vm770, %v761
  %827 = vst.msk [vmem:[%s3 + $0xe0] sm:$0xf] %vm770, %v762
  %828 = vst.msk [vmem:[%s3 + $0xe4] sm:$0xf] %vm770, %v763
  %829 = vst.msk [vmem:[%s3 + $0xe8] sm:$0xf] %vm770, %v764
  %830 = vst.msk [vmem:[%s3 + $0xec] sm:$0xf] %vm770, %v765
  %831 = vst.msk [vmem:[%s3 + $0xf0] sm:$0xf] %vm770, %v766
  %832 = vst.msk [vmem:[%s3 + $0xf4] sm:$0xf] %vm770, %v767
  %833 = vst.msk [vmem:[%s3 + $0xf8] sm:$0xf] %vm770, %v768
  %834 = vst.msk [vmem:[%s3 + $0xfc] sm:$0xf] %vm770, %v769
  // Predicated region
  $region14: #{bottleneck_forward.4} parent=0 // pred_check
    _
  $region15: #{bottleneck_forward.4} parent=0 // pred_check_branch
    %836 = sbr.rel (0) target = $region17
  $region16: #{bottleneck_forward.4} parent=0 // pred_region
    _
  $region17: #{bottleneck_forward.4} parent=0 // pred_fallthru
    _
  // Predicated region
  $region18: #{bottleneck_forward.4} parent=0 // pred_check
    _
  $region19: #{bottleneck_forward.4} parent=0 // pred_check_branch
    %838 = sbr.rel (0) target = $region21
  $region20: #{bottleneck_forward.4} parent=0 // pred_region
    _
  $region21: #{bottleneck_forward.4} parent=0 // pred_fallthru
    _

// kernel: bottleneck_forward.5
$region0: #{bottleneck_forward.5}
  #allocation0 [shape = 'u32[]', space=smem, size = 0x4, offset = 0x4, fixed_abs, tag = 'smem constant byte address 0x4 - core index']
  #allocation1 [shape = 'u32[72,128]{1,0:T(1,128)}', space=vmem, size = 0x9000, scoped, tag = 'internal scratch']
  %s0 = inlined_call_operand.vmem [shape: bf16[2,36,9,4], index: 0, kind: input, shape index: {}]
  %s1 = inlined_call_operand.vmem [shape: bf16[9,4,4], index: 1, kind: input, shape index: {}]
  %s2 = inlined_call_operand.vmem [shape: f32[2,4], index: 2, kind: input, shape index: {}]
  %s3 = inlined_call_operand.vmem [shape: bf16[2,64,4], index: 3, kind: output, shape index: {}]
  %s4 = sld [smem:[#allocation0]]
  $region45: #{bottleneck_forward.5} parent=0
    _
  %s6 = ssub.s32 1, %s4
  %s7 = scalar_select 0, %s6, %s4
  loop: start=0, step=1, limit=4
  $region2: #{bottleneck_forward.5} parent=0 // loop_pre_header
    _
  $region3: #{bottleneck_forward.5} parent=0 // loop_header
    %s9 = sphi 0, %s13
    %p10 = scmp.ge.s32.totalorder %s9, 4
    %s19 = sphi 0, %s21
    %s22 = sphi 0, %s19
    %s23 = sphi 0, %s22
    %s39 = sphi 0, %s23
    %s43 = sphi 0, %s43
    %s45 = sphi 0, %s43
    %s46 = sphi 0, %s45
    %s60 = sphi 0, %s46
    %s64 = sphi 0, %s64
    %s66 = sphi 0, %s64
    %s67 = sphi 0, %s66
    %s81 = sphi 0, %s67
    %s87 = sphi 0, %s89
    %s90 = sphi 0, %s87
    %s91 = sphi 0, %s90
    %s107 = sphi 0, %s91
  $region4: #{bottleneck_forward.5} parent=0 // loop_header_branch
    %12 = sbr.rel (%p10) target = $region8
  $region5: #{bottleneck_forward.5} parent=0 // loop_body
    %s14 = ssub.s32 %s9, 1
    %s15 = ssub.s32 %s9, 2
    %s16 = sadd.s32 %s9, 1
    %s17 = ssub.s32 %s9, %s16
    %p18 = scmp.eq.s32.totalorder %s17, 0
    %s20 = sadd.s32 %s19, 1
    %s21 = scalar_select %p18, %s19, %s20
    %p24 = pneg %p18
    %p25 = scmp.eq.s32.totalorder %s9, 1
    %p26 = por %p24, %p25
    %p27 = scmp.ne.s32.totalorder %s19, %s22
    %p28 = scmp.eq.s32.totalorder %s9, 0
    %p29 = por %p27, %p28
    %p30 = scmp.ne.s32.totalorder %s19, %s22
    %p31 = scmp.eq.s32.totalorder %s14, 1
    %p32 = por %p30, %p31
    %p33 = scmp.ne.s32.totalorder %s22, %s23
    %p34 = scmp.eq.s32.totalorder %s14, 0
    %p35 = por %p33, %p34
    %p36 = scmp.ne.s32.totalorder %s22, %s23
    %p37 = scmp.eq.s32.totalorder %s15, 1
    %p38 = por %p36, %p37
    %p40 = scmp.ne.s32.totalorder %s23, %s39
    %p41 = scmp.eq.s32.totalorder %s15, 0
    %p42 = por %p40, %p41
    %s44 = sadd.s32 %s43, 1
    %p47 = scmp.eq.s32.totalorder %s9, 1
    %p48 = scmp.ne.s32.totalorder %s43, %s45
    %p49 = scmp.eq.s32.totalorder %s9, 0
    %p50 = por %p48, %p49
    %p51 = scmp.ne.s32.totalorder %s43, %s45
    %p52 = scmp.eq.s32.totalorder %s14, 1
    %p53 = por %p51, %p52
    %p54 = scmp.ne.s32.totalorder %s45, %s46
    %p55 = scmp.eq.s32.totalorder %s14, 0
    %p56 = por %p54, %p55
    %p57 = scmp.ne.s32.totalorder %s45, %s46
    %p58 = scmp.eq.s32.totalorder %s15, 1
    %p59 = por %p57, %p58
    %p61 = scmp.ne.s32.totalorder %s46, %s60
    %p62 = scmp.eq.s32.totalorder %s15, 0
    %p63 = por %p61, %p62
    %s65 = sadd.s32 %s64, 1
    %p68 = scmp.eq.s32.totalorder %s9, 1
    %p69 = scmp.ne.s32.totalorder %s64, %s66
    %p70 = scmp.eq.s32.totalorder %s9, 0
    %p71 = por %p69, %p70
    %p72 = scmp.ne.s32.totalorder %s64, %s66
    %p73 = scmp.eq.s32.totalorder %s14, 1
    %p74 = por %p72, %p73
    %p75 = scmp.ne.s32.totalorder %s66, %s67
    %p76 = scmp.eq.s32.totalorder %s14, 0
    %p77 = por %p75, %p76
    %p78 = scmp.ne.s32.totalorder %s66, %s67
    %p79 = scmp.eq.s32.totalorder %s15, 1
    %p80 = por %p78, %p79
    %p82 = scmp.ne.s32.totalorder %s67, %s81
    %p83 = scmp.eq.s32.totalorder %s15, 0
    %p84 = por %p82, %p83
    %s85 = ssub.s32 %s9, %s16
    %p86 = scmp.eq.s32.totalorder %s85, 0
    %s88 = sadd.s32 %s87, 1
    %s89 = scalar_select %p86, %s87, %s88
    %p92 = pneg %p86
    %p93 = scmp.eq.s32.totalorder %s9, 1
    %p94 = por %p92, %p93
    %p95 = scmp.ne.s32.totalorder %s87, %s90
    %p96 = scmp.eq.s32.totalorder %s9, 0
    %p97 = por %p95, %p96
    %p98 = scmp.ne.s32.totalorder %s87, %s90
    %p99 = scmp.eq.s32.totalorder %s14, 1
    %p100 = por %p98, %p99
    %p101 = scmp.ne.s32.totalorder %s90, %s91
    %p102 = scmp.eq.s32.totalorder %s14, 0
    %p103 = por %p101, %p102
    %p104 = scmp.ne.s32.totalorder %s90, %s91
    %p105 = scmp.eq.s32.totalorder %s15, 1
    %p106 = por %p104, %p105
    %p108 = scmp.ne.s32.totalorder %s91, %s107
    %p109 = scmp.eq.s32.totalorder %s15, 0
    %p110 = por %p108, %p109
    %p111 = scmp.le.s32.totalorder 1, %s9
    %p112 = scmp.lt.s32.totalorder %s9, 3
    %p113 = pnand %p111, %p112
    %p114 = pneg %p113
    // Predicated region
    $region9: #{bottleneck_forward.5} parent=5 // pred_check
      _
    $region10: #{bottleneck_forward.5} parent=5 // pred_check_branch
      %116 = sbr.rel (%p113) target = $region12
    $region11: #{bottleneck_forward.5} parent=5 // pred_region
      %s117 = ssub.s32 %s9, 1
      // Predicated region
      $region13: #{bottleneck_forward.5} parent=11 // pred_check
        %p118 = pneg %p56
      $region14: #{bottleneck_forward.5} parent=11 // pred_check_branch
        %120 = sbr.rel (%p118) target = $region16
      $region15: #{bottleneck_forward.5} parent=11 // pred_region
        _
      $region16: #{bottleneck_forward.5} parent=11 // pred_fallthru
        _
      // Predicated region
      $region17: #{bottleneck_forward.5} parent=11 // pred_check
        %p121 = pneg %p77
      $region18: #{bottleneck_forward.5} parent=11 // pred_check_branch
        %123 = sbr.rel (%p121) target = $region20
      $region19: #{bottleneck_forward.5} parent=11 // pred_region
        _
      $region20: #{bottleneck_forward.5} parent=11 // pred_fallthru
        _
    $region12: #{bottleneck_forward.5} parent=5 // pred_fallthru
      _
    %p124 = scmp.lt.s32.totalorder %s9, 2
    // Predicated region
    $region21: #{bottleneck_forward.5} parent=5 // pred_check
      %p125 = pneg %p124
    $region22: #{bottleneck_forward.5} parent=5 // pred_check_branch
      %127 = sbr.rel (%p125) target = $region24
    $region23: #{bottleneck_forward.5} parent=5 // pred_region
      // Predicated region
      $region25: #{bottleneck_forward.5} parent=23 // pred_check
        %p128 = pneg %p29
      $region26: #{bottleneck_forward.5} parent=23 // pred_check_branch
        %130 = sbr.rel (%p128) target = $region28
      $region27: #{bottleneck_forward.5} parent=23 // pred_region
        %p131 = scmp.lt.s32.totalorder %s9, 1
        %s132 = scalar_select %p131, %s9, 1
        %s133 = smul.addr %s132, 72
        %s134 = smul.addr %s133, 4
        %s135 = scalar_lea.vmem %s0, %s134
      $region28: #{bottleneck_forward.5} parent=23 // pred_fallthru
        _
    $region24: #{bottleneck_forward.5} parent=5 // pred_fallthru
      _
    %p136 = scmp.le.s32.totalorder 1, %s9
    %p137 = scmp.lt.s32.totalorder %s9, 3
    %p138 = pnand %p136, %p137
    %p139 = pneg %p138
    // Predicated region
    $region29: #{bottleneck_forward.5} parent=5 // pred_check
      _
    $region30: #{bottleneck_forward.5} parent=5 // pred_check_branch
      %141 = sbr.rel (%p138) target = $region32
    $region31: #{bottleneck_forward.5} parent=5 // pred_region
      %s142 = ssub.s32 %s9, 1
      %p143 = scmp.lt.s32.totalorder %s14, 1
      %s144 = scalar_select %p143, %s14, 1
      %s145 = smul.addr %s144, 72
      %s146 = smul.addr %s145, 4
      %s147 = scalar_lea.vmem %s0, %s146
      %p148 = pneg %p35
      %p149 = pneg %p32
      %p150 = pneg %p56
      %p151 = pneg %p53
      %p152 = pneg %p77
      %p153 = pneg %p74
      %p154 = pneg %p103
      %p155 = pneg %p100
      %p156 = scmp.lt.s32.totalorder %s14, 1
      %s157 = scalar_select %p156, %s14, 1
      %s158 = smul.addr %s157, 8
      %s159 = smul.addr %s158, 4
      %s160 = scalar_lea.vmem %s3, %s159
      %p161 = scmp.lt.s32.totalorder %s14, 1
      %s162 = scalar_select %p161, %s14, 1
      %s163 = smul.addr %s162, 72
      %s164 = smul.addr %s163, 4
      %s165 = scalar_lea.vmem %s0, %s164
      %p166 = scmp.lt.s32.totalorder %s14, 1
      %s167 = scalar_select %p166, %s14, 1
      %s168 = smul.addr %s167, 8
      %s169 = smul.addr %s168, 4
      %s170 = scalar_lea.vmem %s3, %s169
      %v172 = vld [vmem:[%s165] sm:$0xf]
      %v173 = vld [vmem:[%s165 + $0x8] sm:$0xf]
      %v174 = vld [vmem:[%s165 + $0x10] sm:$0xf]
      %v175 = vld [vmem:[%s165 + $0x18] sm:$0xf]
      %v176 = vld [vmem:[%s165 + $0x20] sm:$0xf]
      %v177 = vld [vmem:[%s165 + $0x28] sm:$0xf]
      %v178 = vld [vmem:[%s165 + $0x30] sm:$0xf]
      %v179 = vld [vmem:[%s165 + $0x38] sm:$0xf]
      %v180 = vld [vmem:[%s1] sm:$0x3]
      %s181 = scalar_lea.vmem %s165, 72
      %v182 = vld [vmem:[%s181] sm:$0xf]
      %v183 = vld [vmem:[%s181 + $0x8] sm:$0xf]
      %v184 = vld [vmem:[%s181 + $0x10] sm:$0xf]
      %v185 = vld [vmem:[%s181 + $0x18] sm:$0xf]
      %v186 = vld [vmem:[%s181 + $0x20] sm:$0xf]
      %v187 = vld [vmem:[%s181 + $0x28] sm:$0xf]
      %v188 = vld [vmem:[%s181 + $0x30] sm:$0xf]
      %v189 = vld [vmem:[%s181 + $0x38] sm:$0xf]
      %s190 = scalar_lea.vmem %s1, 2
      %v191 = vld [vmem:[%s190] sm:$0x3]
      %v200 = vunpack.c.l.b16 %v182
      %v201 = vunpack.c.l.b16 %v183
      %v202 = vunpack.c.l.b16 %v184
      %v203 = vunpack.c.l.b16 %v185
      %v204 = vunpack.c.l.b16 %v186
      %v205 = vunpack.c.l.b16 %v187
      %v206 = vunpack.c.l.b16 %v188
      %v207 = vunpack.c.l.b16 %v189
      %v208 = vpack.c.b16 %v201, %v200
      %v209 = vpack.c.b16 %v203, %v202
      %v210 = vpack.c.b16 %v205, %v204
      %v211 = vpack.c.b16 %v207, %v206
      %vm212 = vcmask 31744
      %v214 = vsel %vm212, %v208, 0
      %v217 = vsel %vm212, %v209, 0
      %v220 = vsel %vm212, %v210, 0
      %v223 = vsel %vm212, %v211, 0
      %vm225 = vcmask 1041408
      %v227 = vsel %vm225, %v191, 0
      %229 = vmatpush.bf16.msra.mxu0 0
      %230 = vmatpush.bf16.msra.mxu0 0
      %231 = vmatpush.bf16.msra.mxu0 0
      %232 = vmatpush.bf16.msra.mxu0 0
      %233 = vmatpush.bf16.msra.mxu0 0
      %234 = vmatpush.bf16.msra.mxu0 0
      %235 = vmatpush.bf16.msra.mxu0 0
      %236 = vmatpush.bf16.msra.mxu0 %v227
      %237 = vmatmul.bf16.gmra.mxu0 %v214
      %v238 = vpop.f32.mrf.mxu0
      %v239 = vadd.f32 0.0, %v238
      %v240 = vpop.f32.mrf.mxu0
      %v241 = vadd.f32 0.0, %v240
      %242 = vmatmul.bf16.gmra.mxu0 %v217
      %v243 = vpop.f32.mrf.mxu0
      %v244 = vadd.f32 0.0, %v243
      %v245 = vpop.f32.mrf.mxu0
      %v246 = vadd.f32 0.0, %v245
      %247 = vmatmul.bf16.gmra.mxu0 %v220
      %v248 = vpop.f32.mrf.mxu0
      %v249 = vadd.f32 0.0, %v248
      %v250 = vpop.f32.mrf.mxu0
      %v251 = vadd.f32 0.0, %v250
      %252 = vmatmul.bf16.gmra.mxu0 %v223
      %v253 = vpop.f32.mrf.mxu0
      %v254 = vadd.f32 0.0, %v253
      %v255 = vpop.f32.mrf.mxu0
      %v256 = vadd.f32 0.0, %v255
      %257 = vdwg.mxu0
      %v266 = vunpack.c.l.b16 %v172
      %v267 = vunpack.c.l.b16 %v173
      %v268 = vunpack.c.l.b16 %v174
      %v269 = vunpack.c.l.b16 %v175
      %v270 = vunpack.c.l.b16 %v176
      %v271 = vunpack.c.l.b16 %v177
      %v272 = vunpack.c.l.b16 %v178
      %v273 = vunpack.c.l.b16 %v179
      %v274 = vpack.c.b16 %v267, %v266
      %v275 = vpack.c.b16 %v269, %v268
      %v276 = vpack.c.b16 %v271, %v270
      %v277 = vpack.c.b16 %v273, %v272
      %v279 = vsel %vm212, %v274, 0
      %v282 = vsel %vm212, %v275, 0
      %v285 = vsel %vm212, %v276, 0
      %v288 = vsel %vm212, %v277, 0
      %v291 = vsel %vm225, %v180, 0
      %293 = vmatpush.bf16.msra.mxu0 0
      %294 = vmatpush.bf16.msra.mxu0 0
      %295 = vmatpush.bf16.msra.mxu0 0
      %296 = vmatpush.bf16.msra.mxu0 0
      %297 = vmatpush.bf16.msra.mxu0 0
      %298 = vmatpush.bf16.msra.mxu0 0
      %299 = vmatpush.bf16.msra.mxu0 0
      %300 = vmatpush.bf16.msra.mxu0 %v291
      %301 = vmatmul.bf16.gmra.mxu0 %v279
      %v302 = vpop.f32.mrf.mxu0
      %v303 = vadd.f32 %v239, %v302
      %v304 = vpop.f32.mrf.mxu0
      %v305 = vadd.f32 %v241, %v304
      %306 = vmatmul.bf16.gmra.mxu0 %v282
      %v307 = vpop.f32.mrf.mxu0
      %v308 = vadd.f32 %v244, %v307
      %v309 = vpop.f32.mrf.mxu0
      %v310 = vadd.f32 %v246, %v309
      %311 = vmatmul.bf16.gmra.mxu0 %v285
      %v312 = vpop.f32.mrf.mxu0
      %v313 = vadd.f32 %v249, %v312
      %v314 = vpop.f32.mrf.mxu0
      %v315 = vadd.f32 %v251, %v314
      %316 = vmatmul.bf16.gmra.mxu0 %v288
      %v317 = vpop.f32.mrf.mxu0
      %v318 = vadd.f32 %v254, %v317
      %v319 = vpop.f32.mrf.mxu0
      %v320 = vadd.f32 %v256, %v319
      %321 = vdwg.mxu0
      %v322 = vld [vmem:[%s165] sm:$0xf]
      %v323 = vld [vmem:[%s165 + $0x4] sm:$0x1]
      %v324 = vld [vmem:[%s165 + $0x8] sm:$0xf]
      %v325 = vld [vmem:[%s165 + $0xc] sm:$0x1]
      %v326 = vld [vmem:[%s165 + $0x10] sm:$0xf]
      %v327 = vld [vmem:[%s165 + $0x14] sm:$0x1]
      %v328 = vld [vmem:[%s165 + $0x18] sm:$0xf]
      %v329 = vld [vmem:[%s165 + $0x1c] sm:$0x1]
      %v330 = vld [vmem:[%s165 + $0x20] sm:$0xf]
      %v331 = vld [vmem:[%s165 + $0x24] sm:$0x1]
      %v332 = vld [vmem:[%s165 + $0x28] sm:$0xf]
      %v333 = vld [vmem:[%s165 + $0x2c] sm:$0x1]
      %v334 = vld [vmem:[%s165 + $0x30] sm:$0xf]
      %v335 = vld [vmem:[%s165 + $0x34] sm:$0x1]
      %v336 = vld [vmem:[%s165 + $0x38] sm:$0xf]
      %v337 = vld [vmem:[%s165 + $0x3c] sm:$0x1]
      %vm338 = vsmask.f32 3328
      %vm339 = vsmask.f32 7440
      %vm340 = vmor %vm338, %vm339
      %v342 = vshrl.u32 %v322, 16
      %v344 = vrot.slane %v342, 4
      %v345 = vshll.u32 %v322, 16
      %v347 = vrot.slane %v345, 5
      %v348 = vor.u32 %v344, %v347
      %v349 = vrot.slane %v348, 4
      %v351 = vshll.u32 %v323, 16
      %v353 = vrot.slane %v351, 5
      %v354 = vsel %vm340, %v349, %v353
      %v356 = vshrl.u32 %v324, 16
      %v358 = vrot.slane %v356, 4
      %v359 = vshll.u32 %v324, 16
      %v361 = vrot.slane %v359, 5
      %v362 = vor.u32 %v358, %v361
      %v363 = vrot.slane %v362, 4
      %v365 = vshll.u32 %v325, 16
      %v367 = vrot.slane %v365, 5
      %v368 = vsel %vm340, %v363, %v367
      %v370 = vshrl.u32 %v326, 16
      %v372 = vrot.slane %v370, 4
      %v373 = vshll.u32 %v326, 16
      %v375 = vrot.slane %v373, 5
      %v376 = vor.u32 %v372, %v375
      %v377 = vrot.slane %v376, 4
      %v379 = vshll.u32 %v327, 16
      %v381 = vrot.slane %v379, 5
      %v382 = vsel %vm340, %v377, %v381
      %v384 = vshrl.u32 %v328, 16
      %v386 = vrot.slane %v384, 4
      %v387 = vshll.u32 %v328, 16
      %v389 = vrot.slane %v387, 5
      %v390 = vor.u32 %v386, %v389
      %v391 = vrot.slane %v390, 4
      %v393 = vshll.u32 %v329, 16
      %v395 = vrot.slane %v393, 5
      %v396 = vsel %vm340, %v391, %v395
      %v398 = vshrl.u32 %v330, 16
      %v400 = vrot.slane %v398, 4
      %v401 = vshll.u32 %v330, 16
      %v403 = vrot.slane %v401, 5
      %v404 = vor.u32 %v400, %v403
      %v405 = vrot.slane %v404, 4
      %v407 = vshll.u32 %v331, 16
      %v409 = vrot.slane %v407, 5
      %v410 = vsel %vm340, %v405, %v409
      %v412 = vshrl.u32 %v332, 16
      %v414 = vrot.slane %v412, 4
      %v415 = vshll.u32 %v332, 16
      %v417 = vrot.slane %v415, 5
      %v418 = vor.u32 %v414, %v417
      %v419 = vrot.slane %v418, 4
      %v421 = vshll.u32 %v333, 16
      %v423 = vrot.slane %v421, 5
      %v424 = vsel %vm340, %v419, %v423
      %v426 = vshrl.u32 %v334, 16
      %v428 = vrot.slane %v426, 4
      %v429 = vshll.u32 %v334, 16
      %v431 = vrot.slane %v429, 5
      %v432 = vor.u32 %v428, %v431
      %v433 = vrot.slane %v432, 4
      %v435 = vshll.u32 %v335, 16
      %v437 = vrot.slane %v435, 5
      %v438 = vsel %vm340, %v433, %v437
      %v440 = vshrl.u32 %v336, 16
      %v442 = vrot.slane %v440, 4
      %v443 = vshll.u32 %v336, 16
      %v445 = vrot.slane %v443, 5
      %v446 = vor.u32 %v442, %v445
      %v447 = vrot.slane %v446, 4
      %v449 = vshll.u32 %v337, 16
      %v451 = vrot.slane %v449, 5
      %v452 = vsel %vm340, %v447, %v451
      %s453 = scalar_lea.vmem %s1, 4
      %v454 = vld [vmem:[%s453] sm:$0x3]
      %v455 = vunpack.c.l.b16 %v354
      %v456 = vunpack.c.l.b16 %v368
      %v457 = vunpack.c.l.b16 %v382
      %v458 = vunpack.c.l.b16 %v396
      %v459 = vunpack.c.l.b16 %v410
      %v460 = vunpack.c.l.b16 %v424
      %v461 = vunpack.c.l.b16 %v438
      %v462 = vunpack.c.l.b16 %v452
      %v463 = vpack.c.b16 %v456, %v455
      %v464 = vpack.c.b16 %v458, %v457
      %v465 = vpack.c.b16 %v460, %v459
      %v466 = vpack.c.b16 %v462, %v461
      %v468 = vsel %vm212, %v463, 0
      %v471 = vsel %vm212, %v464, 0
      %v474 = vsel %vm212, %v465, 0
      %v477 = vsel %vm212, %v466, 0
      %v480 = vsel %vm225, %v454, 0
      %482 = vmatpush.bf16.msra.mxu0 0
      %483 = vmatpush.bf16.msra.mxu0 0
      %484 = vmatpush.bf16.msra.mxu0 0
      %485 = vmatpush.bf16.msra.mxu0 0
      %486 = vmatpush.bf16.msra.mxu0 0
      %487 = vmatpush.bf16.msra.mxu0 0
      %488 = vmatpush.bf16.msra.mxu0 0
      %489 = vmatpush.bf16.msra.mxu0 %v480
      %490 = vmatmul.bf16.gmra.mxu0 %v468
      %v491 = vpop.f32.mrf.mxu0
      %v492 = vadd.f32 0.0, %v491
      %v493 = vpop.f32.mrf.mxu0
      %v494 = vadd.f32 0.0, %v493
      %495 = vmatmul.bf16.gmra.mxu0 %v471
      %v496 = vpop.f32.mrf.mxu0
      %v497 = vadd.f32 0.0, %v496
      %v498 = vpop.f32.mrf.mxu0
      %v499 = vadd.f32 0.0, %v498
      %500 = vmatmul.bf16.gmra.mxu0 %v474
      %v501 = vpop.f32.mrf.mxu0
      %v502 = vadd.f32 0.0, %v501
      %v503 = vpop.f32.mrf.mxu0
      %v504 = vadd.f32 0.0, %v503
      %505 = vmatmul.bf16.gmra.mxu0 %v477
      %v506 = vpop.f32.mrf.mxu0
      %v507 = vadd.f32 0.0, %v506
      %v508 = vpop.f32.mrf.mxu0
      %v509 = vadd.f32 0.0, %v508
      %510 = vdwg.mxu0
      %v511 = vadd.f32 %v303, %v492
      %v512 = vadd.f32 %v305, %v494
      %v513 = vadd.f32 %v308, %v497
      %v514 = vadd.f32 %v310, %v499
      %v515 = vadd.f32 %v313, %v502
      %v516 = vadd.f32 %v315, %v504
      %v517 = vadd.f32 %v318, %v507
      %v518 = vadd.f32 %v320, %v509
      %s519 = scalar_lea.vmem %s165, 144
      %v520 = vld [vmem:[%s519] sm:$0xf]
      %v521 = vld [vmem:[%s519 + $0x8] sm:$0xf]
      %v522 = vld [vmem:[%s519 + $0x10] sm:$0xf]
      %v523 = vld [vmem:[%s519 + $0x18] sm:$0xf]
      %v524 = vld [vmem:[%s519 + $0x20] sm:$0xf]
      %v525 = vld [vmem:[%s519 + $0x28] sm:$0xf]
      %v526 = vld [vmem:[%s519 + $0x30] sm:$0xf]
      %v527 = vld [vmem:[%s519 + $0x38] sm:$0xf]
      %s528 = scalar_lea.vmem %s1, 6
      %v529 = vld [vmem:[%s528] sm:$0x3]
      %v538 = vunpack.c.l.b16 %v520
      %v539 = vunpack.c.l.b16 %v521
      %v540 = vunpack.c.l.b16 %v522
      %v541 = vunpack.c.l.b16 %v523
      %v542 = vunpack.c.l.b16 %v524
      %v543 = vunpack.c.l.b16 %v525
      %v544 = vunpack.c.l.b16 %v526
      %v545 = vunpack.c.l.b16 %v527
      %v546 = vpack.c.b16 %v539, %v538
      %v547 = vpack.c.b16 %v541, %v540
      %v548 = vpack.c.b16 %v543, %v542
      %v549 = vpack.c.b16 %v545, %v544
      %v551 = vsel %vm212, %v546, 0
      %v554 = vsel %vm212, %v547, 0
      %v557 = vsel %vm212, %v548, 0
      %v560 = vsel %vm212, %v549, 0
      %v563 = vsel %vm225, %v529, 0
      %565 = vmatpush.bf16.msra.mxu0 0
      %566 = vmatpush.bf16.msra.mxu0 0
      %567 = vmatpush.bf16.msra.mxu0 0
      %568 = vmatpush.bf16.msra.mxu0 0
      %569 = vmatpush.bf16.msra.mxu0 0
      %570 = vmatpush.bf16.msra.mxu0 0
      %571 = vmatpush.bf16.msra.mxu0 0
      %572 = vmatpush.bf16.msra.mxu0 %v563
      %573 = vmatmul.bf16.gmra.mxu0 %v551
      %v574 = vpop.f32.mrf.mxu0
      %v575 = vadd.f32 0.0, %v574
      %v576 = vpop.f32.mrf.mxu0
      %v577 = vadd.f32 0.0, %v576
      %578 = vmatmul.bf16.gmra.mxu0 %v554
      %v579 = vpop.f32.mrf.mxu0
      %v580 = vadd.f32 0.0, %v579
      %v581 = vpop.f32.mrf.mxu0
      %v582 = vadd.f32 0.0, %v581
      %583 = vmatmul.bf16.gmra.mxu0 %v557
      %v584 = vpop.f32.mrf.mxu0
      %v585 = vadd.f32 0.0, %v584
      %v586 = vpop.f32.mrf.mxu0
      %v587 = vadd.f32 0.0, %v586
      %588 = vmatmul.bf16.gmra.mxu0 %v560
      %v589 = vpop.f32.mrf.mxu0
      %v590 = vadd.f32 0.0, %v589
      %v591 = vpop.f32.mrf.mxu0
      %v592 = vadd.f32 0.0, %v591
      %593 = vdwg.mxu0
      %v594 = vadd.f32 %v511, %v575
      %v595 = vadd.f32 %v512, %v577
      %v596 = vadd.f32 %v513, %v580
      %v597 = vadd.f32 %v514, %v582
      %v598 = vadd.f32 %v515, %v585
      %v599 = vadd.f32 %v516, %v587
      %v600 = vadd.f32 %v517, %v590
      %v601 = vadd.f32 %v518, %v592
      %s602 = scalar_lea.vmem %s165, 216
      %v603 = vld [vmem:[%s602] sm:$0xf]
      %v604 = vld [vmem:[%s602 + $0x8] sm:$0xf]
      %v605 = vld [vmem:[%s602 + $0x10] sm:$0xf]
      %v606 = vld [vmem:[%s602 + $0x18] sm:$0xf]
      %v607 = vld [vmem:[%s602 + $0x20] sm:$0xf]
      %v608 = vld [vmem:[%s602 + $0x28] sm:$0xf]
      %v609 = vld [vmem:[%s602 + $0x30] sm:$0xf]
      %v610 = vld [vmem:[%s602 + $0x38] sm:$0xf]
      %s611 = scalar_lea.vmem %s1, 8
      %v612 = vld [vmem:[%s611] sm:$0x3]
      %v621 = vunpack.c.l.b16 %v603
      %v622 = vunpack.c.l.b16 %v604
      %v623 = vunpack.c.l.b16 %v605
      %v624 = vunpack.c.l.b16 %v606
      %v625 = vunpack.c.l.b16 %v607
      %v626 = vunpack.c.l.b16 %v608
      %v627 = vunpack.c.l.b16 %v609
      %v628 = vunpack.c.l.b16 %v610
      %v629 = vpack.c.b16 %v622, %v621
      %v630 = vpack.c.b16 %v624, %v623
      %v631 = vpack.c.b16 %v626, %v625
      %v632 = vpack.c.b16 %v628, %v627
      %v634 = vsel %vm212, %v629, 0
      %v637 = vsel %vm212, %v630, 0
      %v640 = vsel %vm212, %v631, 0
      %v643 = vsel %vm212, %v632, 0
      %v646 = vsel %vm225, %v612, 0
      %648 = vmatpush.bf16.msra.mxu0 0
      %649 = vmatpush.bf16.msra.mxu0 0
      %650 = vmatpush.bf16.msra.mxu0 0
      %651 = vmatpush.bf16.msra.mxu0 0
      %652 = vmatpush.bf16.msra.mxu0 0
      %653 = vmatpush.bf16.msra.mxu0 0
      %654 = vmatpush.bf16.msra.mxu0 0
      %655 = vmatpush.bf16.msra.mxu0 %v646
      %656 = vmatmul.bf16.gmra.mxu0 %v634
      %v657 = vpop.f32.mrf.mxu0
      %v658 = vadd.f32 0.0, %v657
      %v659 = vpop.f32.mrf.mxu0
      %v660 = vadd.f32 0.0, %v659
      %661 = vmatmul.bf16.gmra.mxu0 %v637
      %v662 = vpop.f32.mrf.mxu0
      %v663 = vadd.f32 0.0, %v662
      %v664 = vpop.f32.mrf.mxu0
      %v665 = vadd.f32 0.0, %v664
      %666 = vmatmul.bf16.gmra.mxu0 %v640
      %v667 = vpop.f32.mrf.mxu0
      %v668 = vadd.f32 0.0, %v667
      %v669 = vpop.f32.mrf.mxu0
      %v670 = vadd.f32 0.0, %v669
      %671 = vmatmul.bf16.gmra.mxu0 %v643
      %v672 = vpop.f32.mrf.mxu0
      %v673 = vadd.f32 0.0, %v672
      %v674 = vpop.f32.mrf.mxu0
      %v675 = vadd.f32 0.0, %v674
      %676 = vdwg.mxu0
      %v677 = vadd.f32 %v594, %v658
      %v678 = vadd.f32 %v595, %v660
      %v679 = vadd.f32 %v596, %v663
      %v680 = vadd.f32 %v597, %v665
      %v681 = vadd.f32 %v598, %v668
      %v682 = vadd.f32 %v599, %v670
      %v683 = vadd.f32 %v600, %v673
      %v684 = vadd.f32 %v601, %v675
      %v685 = vld [vmem:[%s519] sm:$0xf]
      %v686 = vld [vmem:[%s519 + $0x4] sm:$0x1]
      %v687 = vld [vmem:[%s519 + $0x8] sm:$0xf]
      %v688 = vld [vmem:[%s519 + $0xc] sm:$0x1]
      %v689 = vld [vmem:[%s519 + $0x10] sm:$0xf]
      %v690 = vld [vmem:[%s519 + $0x14] sm:$0x1]
      %v691 = vld [vmem:[%s519 + $0x18] sm:$0xf]
      %v692 = vld [vmem:[%s519 + $0x1c] sm:$0x1]
      %v693 = vld [vmem:[%s519 + $0x20] sm:$0xf]
      %v694 = vld [vmem:[%s519 + $0x24] sm:$0x1]
      %v695 = vld [vmem:[%s519 + $0x28] sm:$0xf]
      %v696 = vld [vmem:[%s519 + $0x2c] sm:$0x1]
      %v697 = vld [vmem:[%s519 + $0x30] sm:$0xf]
      %v698 = vld [vmem:[%s519 + $0x34] sm:$0x1]
      %v699 = vld [vmem:[%s519 + $0x38] sm:$0xf]
      %v700 = vld [vmem:[%s519 + $0x3c] sm:$0x1]
      %v702 = vshrl.u32 %v685, 16
      %v704 = vrot.slane %v702, 4
      %v705 = vshll.u32 %v685, 16
      %v707 = vrot.slane %v705, 5
      %v708 = vor.u32 %v704, %v707
      %v709 = vrot.slane %v708, 4
      %v711 = vshll.u32 %v686, 16
      %v713 = vrot.slane %v711, 5
      %v714 = vsel %vm340, %v709, %v713
      %v716 = vshrl.u32 %v687, 16
      %v718 = vrot.slane %v716, 4
      %v719 = vshll.u32 %v687, 16
      %v721 = vrot.slane %v719, 5
      %v722 = vor.u32 %v718, %v721
      %v723 = vrot.slane %v722, 4
      %v725 = vshll.u32 %v688, 16
      %v727 = vrot.slane %v725, 5
      %v728 = vsel %vm340, %v723, %v727
      %v730 = vshrl.u32 %v689, 16
      %v732 = vrot.slane %v730, 4
      %v733 = vshll.u32 %v689, 16
      %v735 = vrot.slane %v733, 5
      %v736 = vor.u32 %v732, %v735
      %v737 = vrot.slane %v736, 4
      %v739 = vshll.u32 %v690, 16
      %v741 = vrot.slane %v739, 5
      %v742 = vsel %vm340, %v737, %v741
      %v744 = vshrl.u32 %v691, 16
      %v746 = vrot.slane %v744, 4
      %v747 = vshll.u32 %v691, 16
      %v749 = vrot.slane %v747, 5
      %v750 = vor.u32 %v746, %v749
      %v751 = vrot.slane %v750, 4
      %v753 = vshll.u32 %v692, 16
      %v755 = vrot.slane %v753, 5
      %v756 = vsel %vm340, %v751, %v755
      %v758 = vshrl.u32 %v693, 16
      %v760 = vrot.slane %v758, 4
      %v761 = vshll.u32 %v693, 16
      %v763 = vrot.slane %v761, 5
      %v764 = vor.u32 %v760, %v763
      %v765 = vrot.slane %v764, 4
      %v767 = vshll.u32 %v694, 16
      %v769 = vrot.slane %v767, 5
      %v770 = vsel %vm340, %v765, %v769
      %v772 = vshrl.u32 %v695, 16
      %v774 = vrot.slane %v772, 4
      %v775 = vshll.u32 %v695, 16
      %v777 = vrot.slane %v775, 5
      %v778 = vor.u32 %v774, %v777
      %v779 = vrot.slane %v778, 4
      %v781 = vshll.u32 %v696, 16
      %v783 = vrot.slane %v781, 5
      %v784 = vsel %vm340, %v779, %v783
      %v786 = vshrl.u32 %v697, 16
      %v788 = vrot.slane %v786, 4
      %v789 = vshll.u32 %v697, 16
      %v791 = vrot.slane %v789, 5
      %v792 = vor.u32 %v788, %v791
      %v793 = vrot.slane %v792, 4
      %v795 = vshll.u32 %v698, 16
      %v797 = vrot.slane %v795, 5
      %v798 = vsel %vm340, %v793, %v797
      %v800 = vshrl.u32 %v699, 16
      %v802 = vrot.slane %v800, 4
      %v803 = vshll.u32 %v699, 16
      %v805 = vrot.slane %v803, 5
      %v806 = vor.u32 %v802, %v805
      %v807 = vrot.slane %v806, 4
      %v809 = vshll.u32 %v700, 16
      %v811 = vrot.slane %v809, 5
      %v812 = vsel %vm340, %v807, %v811
      %s813 = scalar_lea.vmem %s1, 10
      %v814 = vld [vmem:[%s813] sm:$0x3]
      %v815 = vunpack.c.l.b16 %v714
      %v816 = vunpack.c.l.b16 %v728
      %v817 = vunpack.c.l.b16 %v742
      %v818 = vunpack.c.l.b16 %v756
      %v819 = vunpack.c.l.b16 %v770
      %v820 = vunpack.c.l.b16 %v784
      %v821 = vunpack.c.l.b16 %v798
      %v822 = vunpack.c.l.b16 %v812
      %v823 = vpack.c.b16 %v816, %v815
      %v824 = vpack.c.b16 %v818, %v817
      %v825 = vpack.c.b16 %v820, %v819
      %v826 = vpack.c.b16 %v822, %v821
      %v828 = vsel %vm212, %v823, 0
      %v831 = vsel %vm212, %v824, 0
      %v834 = vsel %vm212, %v825, 0
      %v837 = vsel %vm212, %v826, 0
      %v840 = vsel %vm225, %v814, 0
      %842 = vmatpush.bf16.msra.mxu0 0
      %843 = vmatpush.bf16.msra.mxu0 0
      %844 = vmatpush.bf16.msra.mxu0 0
      %845 = vmatpush.bf16.msra.mxu0 0
      %846 = vmatpush.bf16.msra.mxu0 0
      %847 = vmatpush.bf16.msra.mxu0 0
      %848 = vmatpush.bf16.msra.mxu0 0
      %849 = vmatpush.bf16.msra.mxu0 %v840
      %850 = vmatmul.bf16.gmra.mxu0 %v828
      %v851 = vpop.f32.mrf.mxu0
      %v852 = vadd.f32 0.0, %v851
      %v853 = vpop.f32.mrf.mxu0
      %v854 = vadd.f32 0.0, %v853
      %855 = vmatmul.bf16.gmra.mxu0 %v831
      %v856 = vpop.f32.mrf.mxu0
      %v857 = vadd.f32 0.0, %v856
      %v858 = vpop.f32.mrf.mxu0
      %v859 = vadd.f32 0.0, %v858
      %860 = vmatmul.bf16.gmra.mxu0 %v834
      %v861 = vpop.f32.mrf.mxu0
      %v862 = vadd.f32 0.0, %v861
      %v863 = vpop.f32.mrf.mxu0
      %v864 = vadd.f32 0.0, %v863
      %865 = vmatmul.bf16.gmra.mxu0 %v837
      %v866 = vpop.f32.mrf.mxu0
      %v867 = vadd.f32 0.0, %v866
      %v868 = vpop.f32.mrf.mxu0
      %v869 = vadd.f32 0.0, %v868
      %870 = vdwg.mxu0
      %v871 = vadd.f32 %v677, %v852
      %v872 = vadd.f32 %v678, %v854
      %v873 = vadd.f32 %v679, %v857
      %v874 = vadd.f32 %v680, %v859
      %v875 = vadd.f32 %v681, %v862
      %v876 = vadd.f32 %v682, %v864
      %v877 = vadd.f32 %v683, %v867
      %v878 = vadd.f32 %v684, %v869
      %s879 = scalar_lea.vmem %s165, 8
      %v880 = vld [vmem:[%s879] sm:$0xf]
      %v881 = vld [vmem:[%s879 + $0x8] sm:$0xf]
      %v882 = vld [vmem:[%s879 + $0x10] sm:$0xf]
      %v883 = vld [vmem:[%s879 + $0x18] sm:$0xf]
      %v884 = vld [vmem:[%s879 + $0x20] sm:$0xf]
      %v885 = vld [vmem:[%s879 + $0x28] sm:$0xf]
      %v886 = vld [vmem:[%s879 + $0x30] sm:$0xf]
      %v887 = vld [vmem:[%s879 + $0x38] sm:$0xf]
      %s888 = scalar_lea.vmem %s1, 12
      %v889 = vld [vmem:[%s888] sm:$0x3]
      %v898 = vunpack.c.l.b16 %v880
      %v899 = vunpack.c.l.b16 %v881
      %v900 = vunpack.c.l.b16 %v882
      %v901 = vunpack.c.l.b16 %v883
      %v902 = vunpack.c.l.b16 %v884
      %v903 = vunpack.c.l.b16 %v885
      %v904 = vunpack.c.l.b16 %v886
      %v905 = vunpack.c.l.b16 %v887
      %v906 = vpack.c.b16 %v899, %v898
      %v907 = vpack.c.b16 %v901, %v900
      %v908 = vpack.c.b16 %v903, %v902
      %v909 = vpack.c.b16 %v905, %v904
      %v911 = vsel %vm212, %v906, 0
      %v914 = vsel %vm212, %v907, 0
      %v917 = vsel %vm212, %v908, 0
      %v920 = vsel %vm212, %v909, 0
      %v923 = vsel %vm225, %v889, 0
      %925 = vmatpush.bf16.msra.mxu0 0
      %926 = vmatpush.bf16.msra.mxu0 0
      %927 = vmatpush.bf16.msra.mxu0 0
      %928 = vmatpush.bf16.msra.mxu0 0
      %929 = vmatpush.bf16.msra.mxu0 0
      %930 = vmatpush.bf16.msra.mxu0 0
      %931 = vmatpush.bf16.msra.mxu0 0
      %932 = vmatpush.bf16.msra.mxu0 %v923
      %933 = vmatmul.bf16.gmra.mxu0 %v911
      %v934 = vpop.f32.mrf.mxu0
      %v935 = vadd.f32 0.0, %v934
      %v936 = vpop.f32.mrf.mxu0
      %v937 = vadd.f32 0.0, %v936
      %938 = vmatmul.bf16.gmra.mxu0 %v914
      %v939 = vpop.f32.mrf.mxu0
      %v940 = vadd.f32 0.0, %v939
      %v941 = vpop.f32.mrf.mxu0
      %v942 = vadd.f32 0.0, %v941
      %943 = vmatmul.bf16.gmra.mxu0 %v917
      %v944 = vpop.f32.mrf.mxu0
      %v945 = vadd.f32 0.0, %v944
      %v946 = vpop.f32.mrf.mxu0
      %v947 = vadd.f32 0.0, %v946
      %948 = vmatmul.bf16.gmra.mxu0 %v920
      %v949 = vpop.f32.mrf.mxu0
      %v950 = vadd.f32 0.0, %v949
      %v951 = vpop.f32.mrf.mxu0
      %v952 = vadd.f32 0.0, %v951
      %953 = vdwg.mxu0
      %v954 = vadd.f32 %v871, %v935
      %v955 = vadd.f32 %v872, %v937
      %v956 = vadd.f32 %v873, %v940
      %v957 = vadd.f32 %v874, %v942
      %v958 = vadd.f32 %v875, %v945
      %v959 = vadd.f32 %v876, %v947
      %v960 = vadd.f32 %v877, %v950
      %v961 = vadd.f32 %v878, %v952
      %s962 = scalar_lea.vmem %s165, 80
      %v963 = vld [vmem:[%s962] sm:$0xf]
      %v964 = vld [vmem:[%s962 + $0x8] sm:$0xf]
      %v965 = vld [vmem:[%s962 + $0x10] sm:$0xf]
      %v966 = vld [vmem:[%s962 + $0x18] sm:$0xf]
      %v967 = vld [vmem:[%s962 + $0x20] sm:$0xf]
      %v968 = vld [vmem:[%s962 + $0x28] sm:$0xf]
      %v969 = vld [vmem:[%s962 + $0x30] sm:$0xf]
      %v970 = vld [vmem:[%s962 + $0x38] sm:$0xf]
      %s971 = scalar_lea.vmem %s1, 14
      %v972 = vld [vmem:[%s971] sm:$0x3]
      %v981 = vunpack.c.l.b16 %v963
      %v982 = vunpack.c.l.b16 %v964
      %v983 = vunpack.c.l.b16 %v965
      %v984 = vunpack.c.l.b16 %v966
      %v985 = vunpack.c.l.b16 %v967
      %v986 = vunpack.c.l.b16 %v968
      %v987 = vunpack.c.l.b16 %v969
      %v988 = vunpack.c.l.b16 %v970
      %v989 = vpack.c.b16 %v982, %v981
      %v990 = vpack.c.b16 %v984, %v983
      %v991 = vpack.c.b16 %v986, %v985
      %v992 = vpack.c.b16 %v988, %v987
      %v994 = vsel %vm212, %v989, 0
      %v997 = vsel %vm212, %v990, 0
      %v1000 = vsel %vm212, %v991, 0
      %v1003 = vsel %vm212, %v992, 0
      %v1006 = vsel %vm225, %v972, 0
      %1008 = vmatpush.bf16.msra.mxu0 0
      %1009 = vmatpush.bf16.msra.mxu0 0
      %1010 = vmatpush.bf16.msra.mxu0 0
      %1011 = vmatpush.bf16.msra.mxu0 0
      %1012 = vmatpush.bf16.msra.mxu0 0
      %1013 = vmatpush.bf16.msra.mxu0 0
      %1014 = vmatpush.bf16.msra.mxu0 0
      %1015 = vmatpush.bf16.msra.mxu0 %v1006
      %1016 = vmatmul.bf16.gmra.mxu0 %v994
      %v1017 = vpop.f32.mrf.mxu0
      %v1018 = vadd.f32 0.0, %v1017
      %v1019 = vpop.f32.mrf.mxu0
      %v1020 = vadd.f32 0.0, %v1019
      %1021 = vmatmul.bf16.gmra.mxu0 %v997
      %v1022 = vpop.f32.mrf.mxu0
      %v1023 = vadd.f32 0.0, %v1022
      %v1024 = vpop.f32.mrf.mxu0
      %v1025 = vadd.f32 0.0, %v1024
      %1026 = vmatmul.bf16.gmra.mxu0 %v1000
      %v1027 = vpop.f32.mrf.mxu0
      %v1028 = vadd.f32 0.0, %v1027
      %v1029 = vpop.f32.mrf.mxu0
      %v1030 = vadd.f32 0.0, %v1029
      %1031 = vmatmul.bf16.gmra.mxu0 %v1003
      %v1032 = vpop.f32.mrf.mxu0
      %v1033 = vadd.f32 0.0, %v1032
      %v1034 = vpop.f32.mrf.mxu0
      %v1035 = vadd.f32 0.0, %v1034
      %1036 = vdwg.mxu0
      %v1037 = vadd.f32 %v954, %v1018
      %v1038 = vadd.f32 %v955, %v1020
      %v1039 = vadd.f32 %v956, %v1023
      %v1040 = vadd.f32 %v957, %v1025
      %v1041 = vadd.f32 %v958, %v1028
      %v1042 = vadd.f32 %v959, %v1030
      %v1043 = vadd.f32 %v960, %v1033
      %v1044 = vadd.f32 %v961, %v1035
      %v1045 = vld [vmem:[%s879] sm:$0xf]
      %v1046 = vld [vmem:[%s879 + $0x4] sm:$0x1]
      %v1047 = vld [vmem:[%s879 + $0x8] sm:$0xf]
      %v1048 = vld [vmem:[%s879 + $0xc] sm:$0x1]
      %v1049 = vld [vmem:[%s879 + $0x10] sm:$0xf]
      %v1050 = vld [vmem:[%s879 + $0x14] sm:$0x1]
      %v1051 = vld [vmem:[%s879 + $0x18] sm:$0xf]
      %v1052 = vld [vmem:[%s879 + $0x1c] sm:$0x1]
      %v1053 = vld [vmem:[%s879 + $0x20] sm:$0xf]
      %v1054 = vld [vmem:[%s879 + $0x24] sm:$0x1]
      %v1055 = vld [vmem:[%s879 + $0x28] sm:$0xf]
      %v1056 = vld [vmem:[%s879 + $0x2c] sm:$0x1]
      %v1057 = vld [vmem:[%s879 + $0x30] sm:$0xf]
      %v1058 = vld [vmem:[%s879 + $0x34] sm:$0x1]
      %v1059 = vld [vmem:[%s879 + $0x38] sm:$0xf]
      %v1060 = vld [vmem:[%s879 + $0x3c] sm:$0x1]
      %v1062 = vshrl.u32 %v1045, 16
      %v1064 = vrot.slane %v1062, 4
      %v1065 = vshll.u32 %v1045, 16
      %v1067 = vrot.slane %v1065, 5
      %v1068 = vor.u32 %v1064, %v1067
      %v1069 = vrot.slane %v1068, 4
      %v1071 = vshll.u32 %v1046, 16
      %v1073 = vrot.slane %v1071, 5
      %v1074 = vsel %vm340, %v1069, %v1073
      %v1076 = vshrl.u32 %v1047, 16
      %v1078 = vrot.slane %v1076, 4
      %v1079 = vshll.u32 %v1047, 16
      %v1081 = vrot.slane %v1079, 5
      %v1082 = vor.u32 %v1078, %v1081
      %v1083 = vrot.slane %v1082, 4
      %v1085 = vshll.u32 %v1048, 16
      %v1087 = vrot.slane %v1085, 5
      %v1088 = vsel %vm340, %v1083, %v1087
      %v1090 = vshrl.u32 %v1049, 16
      %v1092 = vrot.slane %v1090, 4
      %v1093 = vshll.u32 %v1049, 16
      %v1095 = vrot.slane %v1093, 5
      %v1096 = vor.u32 %v1092, %v1095
      %v1097 = vrot.slane %v1096, 4
      %v1099 = vshll.u32 %v1050, 16
      %v1101 = vrot.slane %v1099, 5
      %v1102 = vsel %vm340, %v1097, %v1101
      %v1104 = vshrl.u32 %v1051, 16
      %v1106 = vrot.slane %v1104, 4
      %v1107 = vshll.u32 %v1051, 16
      %v1109 = vrot.slane %v1107, 5
      %v1110 = vor.u32 %v1106, %v1109
      %v1111 = vrot.slane %v1110, 4
      %v1113 = vshll.u32 %v1052, 16
      %v1115 = vrot.slane %v1113, 5
      %v1116 = vsel %vm340, %v1111, %v1115
      %v1118 = vshrl.u32 %v1053, 16
      %v1120 = vrot.slane %v1118, 4
      %v1121 = vshll.u32 %v1053, 16
      %v1123 = vrot.slane %v1121, 5
      %v1124 = vor.u32 %v1120, %v1123
      %v1125 = vrot.slane %v1124, 4
      %v1127 = vshll.u32 %v1054, 16
      %v1129 = vrot.slane %v1127, 5
      %v1130 = vsel %vm340, %v1125, %v1129
      %v1132 = vshrl.u32 %v1055, 16
      %v1134 = vrot.slane %v1132, 4
      %v1135 = vshll.u32 %v1055, 16
      %v1137 = vrot.slane %v1135, 5
      %v1138 = vor.u32 %v1134, %v1137
      %v1139 = vrot.slane %v1138, 4
      %v1141 = vshll.u32 %v1056, 16
      %v1143 = vrot.slane %v1141, 5
      %v1144 = vsel %vm340, %v1139, %v1143
      %v1146 = vshrl.u32 %v1057, 16
      %v1148 = vrot.slane %v1146, 4
      %v1149 = vshll.u32 %v1057, 16
      %v1151 = vrot.slane %v1149, 5
      %v1152 = vor.u32 %v1148, %v1151
      %v1153 = vrot.slane %v1152, 4
      %v1155 = vshll.u32 %v1058, 16
      %v1157 = vrot.slane %v1155, 5
      %v1158 = vsel %vm340, %v1153, %v1157
      %v1160 = vshrl.u32 %v1059, 16
      %v1162 = vrot.slane %v1160, 4
      %v1163 = vshll.u32 %v1059, 16
      %v1165 = vrot.slane %v1163, 5
      %v1166 = vor.u32 %v1162, %v1165
      %v1167 = vrot.slane %v1166, 4
      %v1169 = vshll.u32 %v1060, 16
      %v1171 = vrot.slane %v1169, 5
      %v1172 = vsel %vm340, %v1167, %v1171
      %s1173 = scalar_lea.vmem %s1, 16
      %v1174 = vld [vmem:[%s1173] sm:$0x3]
      %v1175 = vunpack.c.l.b16 %v1074
      %v1176 = vunpack.c.l.b16 %v1088
      %v1177 = vunpack.c.l.b16 %v1102
      %v1178 = vunpack.c.l.b16 %v1116
      %v1179 = vunpack.c.l.b16 %v1130
      %v1180 = vunpack.c.l.b16 %v1144
      %v1181 = vunpack.c.l.b16 %v1158
      %v1182 = vunpack.c.l.b16 %v1172
      %v1183 = vpack.c.b16 %v1176, %v1175
      %v1184 = vpack.c.b16 %v1178, %v1177
      %v1185 = vpack.c.b16 %v1180, %v1179
      %v1186 = vpack.c.b16 %v1182, %v1181
      %v1188 = vsel %vm212, %v1183, 0
      %v1191 = vsel %vm212, %v1184, 0
      %v1194 = vsel %vm212, %v1185, 0
      %v1197 = vsel %vm212, %v1186, 0
      %v1200 = vsel %vm225, %v1174, 0
      %1202 = vmatpush.bf16.msra.mxu0 0
      %1203 = vmatpush.bf16.msra.mxu0 0
      %1204 = vmatpush.bf16.msra.mxu0 0
      %1205 = vmatpush.bf16.msra.mxu0 0
      %1206 = vmatpush.bf16.msra.mxu0 0
      %1207 = vmatpush.bf16.msra.mxu0 0
      %1208 = vmatpush.bf16.msra.mxu0 0
      %1209 = vmatpush.bf16.msra.mxu0 %v1200
      %1210 = vmatmul.bf16.gmra.mxu0 %v1188
      %v1211 = vpop.f32.mrf.mxu0
      %v1212 = vadd.f32 0.0, %v1211
      %v1213 = vpop.f32.mrf.mxu0
      %v1214 = vadd.f32 0.0, %v1213
      %1215 = vmatmul.bf16.gmra.mxu0 %v1191
      %v1216 = vpop.f32.mrf.mxu0
      %v1217 = vadd.f32 0.0, %v1216
      %v1218 = vpop.f32.mrf.mxu0
      %v1219 = vadd.f32 0.0, %v1218
      %1220 = vmatmul.bf16.gmra.mxu0 %v1194
      %v1221 = vpop.f32.mrf.mxu0
      %v1222 = vadd.f32 0.0, %v1221
      %v1223 = vpop.f32.mrf.mxu0
      %v1224 = vadd.f32 0.0, %v1223
      %1225 = vmatmul.bf16.gmra.mxu0 %v1197
      %v1226 = vpop.f32.mrf.mxu0
      %v1227 = vadd.f32 0.0, %v1226
      %v1228 = vpop.f32.mrf.mxu0
      %v1229 = vadd.f32 0.0, %v1228
      %1230 = vdwg.mxu0
      %v1231 = vadd.f32 %v1037, %v1212
      %v1232 = vadd.f32 %v1038, %v1214
      %v1233 = vadd.f32 %v1039, %v1217
      %v1234 = vadd.f32 %v1040, %v1219
      %v1235 = vadd.f32 %v1041, %v1222
      %v1236 = vadd.f32 %v1042, %v1224
      %v1237 = vadd.f32 %v1043, %v1227
      %v1238 = vadd.f32 %v1044, %v1229
      %v1239 = vld [vmem:[%s2] sm:$0x1]
      %v1240 = vperm.slane %v1239, 0
      %v1241 = vmul.f32 %v1231, %v1240
      %v1242 = vmul.f32 %v1232, %v1240
      %v1243 = vmul.f32 %v1233, %v1240
      %v1244 = vmul.f32 %v1234, %v1240
      %v1245 = vmul.f32 %v1235, %v1240
      %v1246 = vmul.f32 %v1236, %v1240
      %v1247 = vmul.f32 %v1237, %v1240
      %v1248 = vmul.f32 %v1238, %v1240
      %v1249 = vld [vmem:[%s2 + $0x1] sm:$0x1]
      %v1250 = vperm.slane %v1249, 0
      %v1251 = vadd.f32 %v1241, %v1250
      %v1252 = vadd.f32 %v1242, %v1250
      %v1253 = vadd.f32 %v1243, %v1250
      %v1254 = vadd.f32 %v1244, %v1250
      %v1255 = vadd.f32 %v1245, %v1250
      %v1256 = vadd.f32 %v1246, %v1250
      %v1257 = vadd.f32 %v1247, %v1250
      %v1258 = vadd.f32 %v1248, %v1250
      %v1259 = vmax.f32 %v1251, 0.0
      %v1260 = vmax.f32 %v1252, 0.0
      %v1261 = vmax.f32 %v1253, 0.0
      %v1262 = vmax.f32 %v1254, 0.0
      %v1263 = vmax.f32 %v1255, 0.0
      %v1264 = vmax.f32 %v1256, 0.0
      %v1265 = vmax.f32 %v1257, 0.0
      %v1266 = vmax.f32 %v1258, 0.0
      %v1267 = vpack.c.bf16 %v1259, %v1259
      %v1268 = vpack.c.bf16 %v1260, %v1260
      %v1269 = vpack.c.bf16 %v1261, %v1261
      %v1270 = vpack.c.bf16 %v1262, %v1262
      %v1271 = vpack.c.bf16 %v1263, %v1263
      %v1272 = vpack.c.bf16 %v1264, %v1264
      %v1273 = vpack.c.bf16 %v1265, %v1265
      %v1274 = vpack.c.bf16 %v1266, %v1266
      %vm1275 = vcmask 27648
      %1276 = vst.msk [vmem:[%s170] sm:$0xf] %vm1275, %v1267
      %1277 = vst.msk [vmem:[%s170 + $0x4] sm:$0xf] %vm1275, %v1268
      %1278 = vst.msk [vmem:[%s170 + $0x8] sm:$0xf] %vm1275, %v1269
      %1279 = vst.msk [vmem:[%s170 + $0xc] sm:$0xf] %vm1275, %v1270
      %1280 = vst.msk [vmem:[%s170 + $0x10] sm:$0xf] %vm1275, %v1271
      %1281 = vst.msk [vmem:[%s170 + $0x14] sm:$0xf] %vm1275, %v1272
      %1282 = vst.msk [vmem:[%s170 + $0x18] sm:$0xf] %vm1275, %v1273
      %1283 = vst.msk [vmem:[%s170 + $0x1c] sm:$0xf] %vm1275, %v1274
      %p1284 = scmp.lt.s32.totalorder %s14, 1
      %s1285 = scalar_select %p1284, %s14, 1
      %s1286 = smul.addr %s1285, 8
      %s1287 = smul.addr %s1286, 4
      %s1288 = scalar_lea.vmem %s3, %s1287
      // Predicated region
      $region33: #{bottleneck_forward.5} parent=31 // pred_check
        %p1289 = pneg %p100
      $region34: #{bottleneck_forward.5} parent=31 // pred_check_branch
        %1291 = sbr.rel (%p1289) target = $region36
      $region35: #{bottleneck_forward.5} parent=31 // pred_region
        _
      $region36: #{bottleneck_forward.5} parent=31 // pred_fallthru
        _
    $region32: #{bottleneck_forward.5} parent=5 // pred_fallthru
      _
    %p1292 = scmp.le.s32.totalorder 2, %s9
    // Predicated region
    $region37: #{bottleneck_forward.5} parent=5 // pred_check
      %p1293 = pneg %p1292
    $region38: #{bottleneck_forward.5} parent=5 // pred_check_branch
      %1295 = sbr.rel (%p1293) target = $region40
    $region39: #{bottleneck_forward.5} parent=5 // pred_region
      %s1296 = ssub.s32 %s9, 2
      // Predicated region
      $region41: #{bottleneck_forward.5} parent=39 // pred_check
        %p1297 = pneg %p106
      $region42: #{bottleneck_forward.5} parent=39 // pred_check_branch
        %1299 = sbr.rel (%p1297) target = $region44
      $region43: #{bottleneck_forward.5} parent=39 // pred_region
        %p1300 = scmp.lt.s32.totalorder %s15, 1
        %s1301 = scalar_select %p1300, %s15, 1
        %s1302 = smul.addr %s1301, 8
        %s1303 = smul.addr %s1302, 4
        %s1304 = scalar_lea.vmem %s3, %s1303
      $region44: #{bottleneck_forward.5} parent=39 // pred_fallthru
        _
    $region40: #{bottleneck_forward.5} parent=5 // pred_fallthru
      _
  $region6: #{bottleneck_forward.5} parent=0 // loop_footer
    %s13 = sadd.s32 1, %s9
  $region7: #{bottleneck_forward.5} parent=0 // loop_footer_branch
    %8 = sbr.rel target = $region3
  $region8: #{bottleneck_forward.5} parent=0 // loop_exit
    _

// kernel: bottleneck_forward.7
$region0: #{bottleneck_forward.7}
  #allocation0 [shape = 'u32[]', space=smem, size = 0x4, offset = 0x4, fixed_abs, tag = 'smem constant byte address 0x4 - core index']
  #allocation1 [shape = 'u32[72,128]{1,0:T(1,128)}', space=vmem, size = 0x9000, scoped, tag = 'internal scratch']
  %s0 = inlined_call_operand.vmem [shape: bf16[128,4], index: 0, kind: input, shape index: {}]
  %s1 = inlined_call_operand.vmem [shape: bf16[4,16], index: 1, kind: input, shape index: {}]
  %s2 = inlined_call_operand.vmem [shape: f32[2,16], index: 2, kind: input, shape index: {}]
  %s3 = inlined_call_operand.vmem [shape: bf16[128,16], index: 3, kind: input, shape index: {}]
  %s4 = inlined_call_operand.hbm [shape: f32[128,16], index: 4, kind: output, shape index: {}]
  %s5 = sld [smem:[#allocation0]]
  $region26: #{bottleneck_forward.7} parent=0
    _
  %s7 = ssub.s32 1, %s5
  %s8 = scalar_select 0, %s7, %s5
  $region1: #{bottleneck_forward.7} parent=0
    #allocation2 [shape = 'u8[65536]{0}', space=vmem, size = 0x10000, scoped, tag = 'output window, operand 0, single buffered']
    #allocation3 [shape = 's32[1]{0}', space=sflag, size = 0x4, scoped, tag = 'scoped memory for bottleneck_forward.7']
    %9 = vsyncpa [#allocation3], 0
    // Predicated region
    $region2: #{bottleneck_forward.7} parent=1 // pred_check
      _
    $region3: #{bottleneck_forward.7} parent=1 // pred_check_branch
      %11 = sbr.rel (0) target = $region5
    $region4: #{bottleneck_forward.7} parent=1 // pred_region
      _
    $region5: #{bottleneck_forward.7} parent=1 // pred_fallthru
      _
    // Predicated region
    $region6: #{bottleneck_forward.7} parent=1 // pred_check
      _
    $region7: #{bottleneck_forward.7} parent=1 // pred_check_branch
      %13 = sbr.rel (0) target = $region9
    $region8: #{bottleneck_forward.7} parent=1 // pred_region
      _
    $region9: #{bottleneck_forward.7} parent=1 // pred_fallthru
      _
    // Predicated region
    $region10: #{bottleneck_forward.7} parent=1 // pred_check
      _
    $region11: #{bottleneck_forward.7} parent=1 // pred_check_branch
      %15 = sbr.rel (0) target = $region13
    $region12: #{bottleneck_forward.7} parent=1 // pred_region
      _
    $region13: #{bottleneck_forward.7} parent=1 // pred_fallthru
      _
    // Predicated region
    $region14: #{bottleneck_forward.7} parent=1 // pred_check
      _
    $region15: #{bottleneck_forward.7} parent=1 // pred_check_branch
      %17 = sbr.rel (0) target = $region17
    $region16: #{bottleneck_forward.7} parent=1 // pred_region
      _
    $region17: #{bottleneck_forward.7} parent=1 // pred_fallthru
      _
    %v19 = vld [vmem:[%s0] sm:$0xf]
    %v20 = vld [vmem:[%s0 + $0x4] sm:$0xf]
    %v21 = vld [vmem:[%s0 + $0x8] sm:$0xf]
    %v22 = vld [vmem:[%s0 + $0xc] sm:$0xf]
    %v23 = vld [vmem:[%s0 + $0x10] sm:$0xf]
    %v24 = vld [vmem:[%s0 + $0x14] sm:$0xf]
    %v25 = vld [vmem:[%s0 + $0x18] sm:$0xf]
    %v26 = vld [vmem:[%s0 + $0x1c] sm:$0xf]
    %v27 = vld [vmem:[%s0 + $0x20] sm:$0xf]
    %v28 = vld [vmem:[%s0 + $0x24] sm:$0xf]
    %v29 = vld [vmem:[%s0 + $0x28] sm:$0xf]
    %v30 = vld [vmem:[%s0 + $0x2c] sm:$0xf]
    %v31 = vld [vmem:[%s0 + $0x30] sm:$0xf]
    %v32 = vld [vmem:[%s0 + $0x34] sm:$0xf]
    %v33 = vld [vmem:[%s0 + $0x38] sm:$0xf]
    %v34 = vld [vmem:[%s0 + $0x3c] sm:$0xf]
    %v35 = vld [vmem:[%s1] sm:$0x3]
    %v52 = vunpack.c.l.b16 %v19
    %v53 = vunpack.c.l.b16 %v20
    %v54 = vunpack.c.l.b16 %v21
    %v55 = vunpack.c.l.b16 %v22
    %v56 = vunpack.c.l.b16 %v23
    %v57 = vunpack.c.l.b16 %v24
    %v58 = vunpack.c.l.b16 %v25
    %v59 = vunpack.c.l.b16 %v26
    %v60 = vunpack.c.l.b16 %v27
    %v61 = vunpack.c.l.b16 %v28
    %v62 = vunpack.c.l.b16 %v29
    %v63 = vunpack.c.l.b16 %v30
    %v64 = vunpack.c.l.b16 %v31
    %v65 = vunpack.c.l.b16 %v32
    %v66 = vunpack.c.l.b16 %v33
    %v67 = vunpack.c.l.b16 %v34
    %v68 = vpack.c.b16 %v53, %v52
    %v69 = vpack.c.b16 %v55, %v54
    %v70 = vpack.c.b16 %v57, %v56
    %v71 = vpack.c.b16 %v59, %v58
    %v72 = vpack.c.b16 %v61, %v60
    %v73 = vpack.c.b16 %v63, %v62
    %v74 = vpack.c.b16 %v65, %v64
    %v75 = vpack.c.b16 %v67, %v66
    %vm76 = vcmask 31744
    %v78 = vsel %vm76, %v68, 0
    %v81 = vsel %vm76, %v69, 0
    %v84 = vsel %vm76, %v70, 0
    %v87 = vsel %vm76, %v71, 0
    %v90 = vsel %vm76, %v72, 0
    %v93 = vsel %vm76, %v73, 0
    %v96 = vsel %vm76, %v74, 0
    %v99 = vsel %vm76, %v75, 0
    %vm101 = vcmask 1041408
    %v103 = vsel %vm101, %v35, 0
    %105 = vmatpush.bf16.msra.mxu0 0
    %106 = vmatpush.bf16.msra.mxu0 0
    %107 = vmatpush.bf16.msra.mxu0 0
    %108 = vmatpush.bf16.msra.mxu0 0
    %109 = vmatpush.bf16.msra.mxu0 0
    %110 = vmatpush.bf16.msra.mxu0 0
    %111 = vmatpush.bf16.msra.mxu0 0
    %112 = vmatpush.bf16.msra.mxu0 %v103
    %113 = vmatmul.bf16.gmra.mxu0 %v78
    %v114 = vpop.f32.mrf.mxu0
    %v115 = vadd.f32 0.0, %v114
    %v116 = vpop.f32.mrf.mxu0
    %v117 = vadd.f32 0.0, %v116
    %118 = vmatmul.bf16.gmra.mxu0 %v81
    %v119 = vpop.f32.mrf.mxu0
    %v120 = vadd.f32 0.0, %v119
    %v121 = vpop.f32.mrf.mxu0
    %v122 = vadd.f32 0.0, %v121
    %123 = vmatmul.bf16.gmra.mxu0 %v84
    %v124 = vpop.f32.mrf.mxu0
    %v125 = vadd.f32 0.0, %v124
    %v126 = vpop.f32.mrf.mxu0
    %v127 = vadd.f32 0.0, %v126
    %128 = vmatmul.bf16.gmra.mxu0 %v87
    %v129 = vpop.f32.mrf.mxu0
    %v130 = vadd.f32 0.0, %v129
    %v131 = vpop.f32.mrf.mxu0
    %v132 = vadd.f32 0.0, %v131
    %133 = vmatmul.bf16.gmra.mxu0 %v90
    %v134 = vpop.f32.mrf.mxu0
    %v135 = vadd.f32 0.0, %v134
    %v136 = vpop.f32.mrf.mxu0
    %v137 = vadd.f32 0.0, %v136
    %138 = vmatmul.bf16.gmra.mxu0 %v93
    %v139 = vpop.f32.mrf.mxu0
    %v140 = vadd.f32 0.0, %v139
    %v141 = vpop.f32.mrf.mxu0
    %v142 = vadd.f32 0.0, %v141
    %143 = vmatmul.bf16.gmra.mxu0 %v96
    %v144 = vpop.f32.mrf.mxu0
    %v145 = vadd.f32 0.0, %v144
    %v146 = vpop.f32.mrf.mxu0
    %v147 = vadd.f32 0.0, %v146
    %148 = vmatmul.bf16.gmra.mxu0 %v99
    %v149 = vpop.f32.mrf.mxu0
    %v150 = vadd.f32 0.0, %v149
    %v151 = vpop.f32.mrf.mxu0
    %v152 = vadd.f32 0.0, %v151
    %153 = vdwg.mxu0
    %v154 = vld [vmem:[%s2] sm:$0x1]
    %v155 = vperm.slane %v154, 0
    %v156 = vmul.f32 %v115, %v155
    %v157 = vmul.f32 %v117, %v155
    %v158 = vmul.f32 %v120, %v155
    %v159 = vmul.f32 %v122, %v155
    %v160 = vmul.f32 %v125, %v155
    %v161 = vmul.f32 %v127, %v155
    %v162 = vmul.f32 %v130, %v155
    %v163 = vmul.f32 %v132, %v155
    %v164 = vmul.f32 %v135, %v155
    %v165 = vmul.f32 %v137, %v155
    %v166 = vmul.f32 %v140, %v155
    %v167 = vmul.f32 %v142, %v155
    %v168 = vmul.f32 %v145, %v155
    %v169 = vmul.f32 %v147, %v155
    %v170 = vmul.f32 %v150, %v155
    %v171 = vmul.f32 %v152, %v155
    %v172 = vld [vmem:[%s2 + $0x1] sm:$0x1]
    %v173 = vperm.slane %v172, 0
    %v174 = vadd.f32 %v156, %v173
    %v175 = vadd.f32 %v157, %v173
    %v176 = vadd.f32 %v158, %v173
    %v177 = vadd.f32 %v159, %v173
    %v178 = vadd.f32 %v160, %v173
    %v179 = vadd.f32 %v161, %v173
    %v180 = vadd.f32 %v162, %v173
    %v181 = vadd.f32 %v163, %v173
    %v182 = vadd.f32 %v164, %v173
    %v183 = vadd.f32 %v165, %v173
    %v184 = vadd.f32 %v166, %v173
    %v185 = vadd.f32 %v167, %v173
    %v186 = vadd.f32 %v168, %v173
    %v187 = vadd.f32 %v169, %v173
    %v188 = vadd.f32 %v170, %v173
    %v189 = vadd.f32 %v171, %v173
    %v190 = vld [vmem:[%s3] sm:$0xf]
    %v191 = vld [vmem:[%s3 + $0x4] sm:$0xf]
    %v192 = vld [vmem:[%s3 + $0x8] sm:$0xf]
    %v193 = vld [vmem:[%s3 + $0xc] sm:$0xf]
    %v194 = vld [vmem:[%s3 + $0x10] sm:$0xf]
    %v195 = vld [vmem:[%s3 + $0x14] sm:$0xf]
    %v196 = vld [vmem:[%s3 + $0x18] sm:$0xf]
    %v197 = vld [vmem:[%s3 + $0x1c] sm:$0xf]
    %v198 = vld [vmem:[%s3 + $0x20] sm:$0xf]
    %v199 = vld [vmem:[%s3 + $0x24] sm:$0xf]
    %v200 = vld [vmem:[%s3 + $0x28] sm:$0xf]
    %v201 = vld [vmem:[%s3 + $0x2c] sm:$0xf]
    %v202 = vld [vmem:[%s3 + $0x30] sm:$0xf]
    %v203 = vld [vmem:[%s3 + $0x34] sm:$0xf]
    %v204 = vld [vmem:[%s3 + $0x38] sm:$0xf]
    %v205 = vld [vmem:[%s3 + $0x3c] sm:$0xf]
    %v206 = vunpack.c.l.bf16 %v190
    %v207 = vunpack.c.l.bf16 %v191
    %v208 = vunpack.c.l.bf16 %v192
    %v209 = vunpack.c.l.bf16 %v193
    %v210 = vunpack.c.l.bf16 %v194
    %v211 = vunpack.c.l.bf16 %v195
    %v212 = vunpack.c.l.bf16 %v196
    %v213 = vunpack.c.l.bf16 %v197
    %v214 = vunpack.c.l.bf16 %v198
    %v215 = vunpack.c.l.bf16 %v199
    %v216 = vunpack.c.l.bf16 %v200
    %v217 = vunpack.c.l.bf16 %v201
    %v218 = vunpack.c.l.bf16 %v202
    %v219 = vunpack.c.l.bf16 %v203
    %v220 = vunpack.c.l.bf16 %v204
    %v221 = vunpack.c.l.bf16 %v205
    %v222 = vadd.f32 %v174, %v206
    %v223 = vadd.f32 %v175, %v207
    %v224 = vadd.f32 %v176, %v208
    %v225 = vadd.f32 %v177, %v209
    %v226 = vadd.f32 %v178, %v210
    %v227 = vadd.f32 %v179, %v211
    %v228 = vadd.f32 %v180, %v212
    %v229 = vadd.f32 %v181, %v213
    %v230 = vadd.f32 %v182, %v214
    %v231 = vadd.f32 %v183, %v215
    %v232 = vadd.f32 %v184, %v216
    %v233 = vadd.f32 %v185, %v217
    %v234 = vadd.f32 %v186, %v218
    %v235 = vadd.f32 %v187, %v219
    %v236 = vadd.f32 %v188, %v220
    %v237 = vadd.f32 %v189, %v221
    %v238 = vmax.f32 %v222, 0.0
    %v239 = vmax.f32 %v223, 0.0
    %v240 = vmax.f32 %v224, 0.0
    %v241 = vmax.f32 %v225, 0.0
    %v242 = vmax.f32 %v226, 0.0
    %v243 = vmax.f32 %v227, 0.0
    %v244 = vmax.f32 %v228, 0.0
    %v245 = vmax.f32 %v229, 0.0
    %v246 = vmax.f32 %v230, 0.0
    %v247 = vmax.f32 %v231, 0.0
    %v248 = vmax.f32 %v232, 0.0
    %v249 = vmax.f32 %v233, 0.0
    %v250 = vmax.f32 %v234, 0.0
    %v251 = vmax.f32 %v235, 0.0
    %v252 = vmax.f32 %v236, 0.0
    %v253 = vmax.f32 %v237, 0.0
    %vm254 = vcmask 130048
    %255 = vst.msk [vmem:[#allocation2] sm:$0xff] %vm254, %v238
    %256 = vst.msk [vmem:[#allocation2 + $0x8] sm:$0xff] %vm254, %v239
    %257 = vst.msk [vmem:[#allocation2 + $0x10] sm:$0xff] %vm254, %v240
    %258 = vst.msk [vmem:[#allocation2 + $0x18] sm:$0xff] %vm254, %v241
    %259 = vst.msk [vmem:[#allocation2 + $0x20] sm:$0xff] %vm254, %v242
    %260 = vst.msk [vmem:[#allocation2 + $0x28] sm:$0xff] %vm254, %v243
    %261 = vst.msk [vmem:[#allocation2 + $0x30] sm:$0xff] %vm254, %v244
    %262 = vst.msk [vmem:[#allocation2 + $0x38] sm:$0xff] %vm254, %v245
    %263 = vst.msk [vmem:[#allocation2 + $0x40] sm:$0xff] %vm254, %v246
    %264 = vst.msk [vmem:[#allocation2 + $0x48] sm:$0xff] %vm254, %v247
    %265 = vst.msk [vmem:[#allocation2 + $0x50] sm:$0xff] %vm254, %v248
    %266 = vst.msk [vmem:[#allocation2 + $0x58] sm:$0xff] %vm254, %v249
    %267 = vst.msk [vmem:[#allocation2 + $0x60] sm:$0xff] %vm254, %v250
    %268 = vst.msk [vmem:[#allocation2 + $0x68] sm:$0xff] %vm254, %v251
    %269 = vst.msk [vmem:[#allocation2 + $0x70] sm:$0xff] %vm254, %v252
    %270 = vst.msk [vmem:[#allocation2 + $0x78] sm:$0xff] %vm254, %v253
    // Predicated region
    $region18: #{bottleneck_forward.7} parent=1 // pred_check
      _
    $region19: #{bottleneck_forward.7} parent=1 // pred_check_branch
      %272 = sbr.rel (0) target = $region21
    $region20: #{bottleneck_forward.7} parent=1 // pred_region
      %274 = vsyncadd [#allocation3], 0
      %s275 = sshll.u32 [#allocation2], 4
      %s276 = int_to_ptr.vmem [resolvable:$true] %s275
      %s277 = sshll.u32 %s4, 4
      %s278 = int_to_ptr.hbm [resolvable:$true] %s277
      %283 = dma.vmem_to_hbm [thread:$0]  %s276, 2048, %s278, [#allocation3], 128, 128, 8
    $region21: #{bottleneck_forward.7} parent=1 // pred_fallthru
      _
    // Predicated region
    $region22: #{bottleneck_forward.7} parent=1 // pred_check
      _
    $region23: #{bottleneck_forward.7} parent=1 // pred_check_branch
      %285 = sbr.rel (0) target = $region25
    $region24: #{bottleneck_forward.7} parent=1 // pred_region
      %287 = dma.done [#allocation3], 2048
    $region25: #{bottleneck_forward.7} parent=1 // pred_fallthru
      _
    %288 = vsyncpa [#allocation3], 1

// kernel: bottleneck_forward.6
$region0: #{bottleneck_forward.6}
  #allocation0 [shape = 'u32[]', space=smem, size = 0x4, offset = 0x4, fixed_abs, tag = 'smem constant byte address 0x4 - core index']
  #allocation1 [shape = 'u32[72,128]{1,0:T(1,128)}', space=vmem, size = 0x9000, scoped, tag = 'internal scratch']
  %s0 = inlined_call_operand.vmem [shape: bf16[128,4], index: 0, kind: input, shape index: {}]
  %s1 = inlined_call_operand.vmem [shape: bf16[4,16], index: 1, kind: input, shape index: {}]
  %s2 = inlined_call_operand.vmem [shape: f32[2,16], index: 2, kind: input, shape index: {}]
  %s3 = inlined_call_operand.vmem [shape: bf16[128,16], index: 3, kind: output, shape index: {}]
  %s4 = sld [smem:[#allocation0]]
  $region22: #{bottleneck_forward.6} parent=0
    _
  %s6 = ssub.s32 1, %s4
  %s7 = scalar_select 0, %s6, %s4
  // Predicated region
  $region2: #{bottleneck_forward.6} parent=0 // pred_check
    _
  $region3: #{bottleneck_forward.6} parent=0 // pred_check_branch
    %9 = sbr.rel (0) target = $region5
  $region4: #{bottleneck_forward.6} parent=0 // pred_region
    _
  $region5: #{bottleneck_forward.6} parent=0 // pred_fallthru
    _
  // Predicated region
  $region6: #{bottleneck_forward.6} parent=0 // pred_check
    _
  $region7: #{bottleneck_forward.6} parent=0 // pred_check_branch
    %11 = sbr.rel (0) target = $region9
  $region8: #{bottleneck_forward.6} parent=0 // pred_region
    _
  $region9: #{bottleneck_forward.6} parent=0 // pred_fallthru
    _
  // Predicated region
  $region10: #{bottleneck_forward.6} parent=0 // pred_check
    _
  $region11: #{bottleneck_forward.6} parent=0 // pred_check_branch
    %13 = sbr.rel (0) target = $region13
  $region12: #{bottleneck_forward.6} parent=0 // pred_region
    _
  $region13: #{bottleneck_forward.6} parent=0 // pred_fallthru
    _
  %v15 = vld [vmem:[%s0] sm:$0xf]
  %v16 = vld [vmem:[%s0 + $0x4] sm:$0xf]
  %v17 = vld [vmem:[%s0 + $0x8] sm:$0xf]
  %v18 = vld [vmem:[%s0 + $0xc] sm:$0xf]
  %v19 = vld [vmem:[%s0 + $0x10] sm:$0xf]
  %v20 = vld [vmem:[%s0 + $0x14] sm:$0xf]
  %v21 = vld [vmem:[%s0 + $0x18] sm:$0xf]
  %v22 = vld [vmem:[%s0 + $0x1c] sm:$0xf]
  %v23 = vld [vmem:[%s0 + $0x20] sm:$0xf]
  %v24 = vld [vmem:[%s0 + $0x24] sm:$0xf]
  %v25 = vld [vmem:[%s0 + $0x28] sm:$0xf]
  %v26 = vld [vmem:[%s0 + $0x2c] sm:$0xf]
  %v27 = vld [vmem:[%s0 + $0x30] sm:$0xf]
  %v28 = vld [vmem:[%s0 + $0x34] sm:$0xf]
  %v29 = vld [vmem:[%s0 + $0x38] sm:$0xf]
  %v30 = vld [vmem:[%s0 + $0x3c] sm:$0xf]
  %v31 = vld [vmem:[%s1] sm:$0x3]
  %v48 = vunpack.c.l.b16 %v15
  %v49 = vunpack.c.l.b16 %v16
  %v50 = vunpack.c.l.b16 %v17
  %v51 = vunpack.c.l.b16 %v18
  %v52 = vunpack.c.l.b16 %v19
  %v53 = vunpack.c.l.b16 %v20
  %v54 = vunpack.c.l.b16 %v21
  %v55 = vunpack.c.l.b16 %v22
  %v56 = vunpack.c.l.b16 %v23
  %v57 = vunpack.c.l.b16 %v24
  %v58 = vunpack.c.l.b16 %v25
  %v59 = vunpack.c.l.b16 %v26
  %v60 = vunpack.c.l.b16 %v27
  %v61 = vunpack.c.l.b16 %v28
  %v62 = vunpack.c.l.b16 %v29
  %v63 = vunpack.c.l.b16 %v30
  %v64 = vpack.c.b16 %v49, %v48
  %v65 = vpack.c.b16 %v51, %v50
  %v66 = vpack.c.b16 %v53, %v52
  %v67 = vpack.c.b16 %v55, %v54
  %v68 = vpack.c.b16 %v57, %v56
  %v69 = vpack.c.b16 %v59, %v58
  %v70 = vpack.c.b16 %v61, %v60
  %v71 = vpack.c.b16 %v63, %v62
  %vm72 = vcmask 31744
  %v74 = vsel %vm72, %v64, 0
  %v77 = vsel %vm72, %v65, 0
  %v80 = vsel %vm72, %v66, 0
  %v83 = vsel %vm72, %v67, 0
  %v86 = vsel %vm72, %v68, 0
  %v89 = vsel %vm72, %v69, 0
  %v92 = vsel %vm72, %v70, 0
  %v95 = vsel %vm72, %v71, 0
  %vm97 = vcmask 1041408
  %v99 = vsel %vm97, %v31, 0
  %101 = vmatpush.bf16.msra.mxu0 0
  %102 = vmatpush.bf16.msra.mxu0 0
  %103 = vmatpush.bf16.msra.mxu0 0
  %104 = vmatpush.bf16.msra.mxu0 0
  %105 = vmatpush.bf16.msra.mxu0 0
  %106 = vmatpush.bf16.msra.mxu0 0
  %107 = vmatpush.bf16.msra.mxu0 0
  %108 = vmatpush.bf16.msra.mxu0 %v99
  %109 = vmatmul.bf16.gmra.mxu0 %v74
  %v110 = vpop.f32.mrf.mxu0
  %v111 = vadd.f32 0.0, %v110
  %v112 = vpop.f32.mrf.mxu0
  %v113 = vadd.f32 0.0, %v112
  %114 = vmatmul.bf16.gmra.mxu0 %v77
  %v115 = vpop.f32.mrf.mxu0
  %v116 = vadd.f32 0.0, %v115
  %v117 = vpop.f32.mrf.mxu0
  %v118 = vadd.f32 0.0, %v117
  %119 = vmatmul.bf16.gmra.mxu0 %v80
  %v120 = vpop.f32.mrf.mxu0
  %v121 = vadd.f32 0.0, %v120
  %v122 = vpop.f32.mrf.mxu0
  %v123 = vadd.f32 0.0, %v122
  %124 = vmatmul.bf16.gmra.mxu0 %v83
  %v125 = vpop.f32.mrf.mxu0
  %v126 = vadd.f32 0.0, %v125
  %v127 = vpop.f32.mrf.mxu0
  %v128 = vadd.f32 0.0, %v127
  %129 = vmatmul.bf16.gmra.mxu0 %v86
  %v130 = vpop.f32.mrf.mxu0
  %v131 = vadd.f32 0.0, %v130
  %v132 = vpop.f32.mrf.mxu0
  %v133 = vadd.f32 0.0, %v132
  %134 = vmatmul.bf16.gmra.mxu0 %v89
  %v135 = vpop.f32.mrf.mxu0
  %v136 = vadd.f32 0.0, %v135
  %v137 = vpop.f32.mrf.mxu0
  %v138 = vadd.f32 0.0, %v137
  %139 = vmatmul.bf16.gmra.mxu0 %v92
  %v140 = vpop.f32.mrf.mxu0
  %v141 = vadd.f32 0.0, %v140
  %v142 = vpop.f32.mrf.mxu0
  %v143 = vadd.f32 0.0, %v142
  %144 = vmatmul.bf16.gmra.mxu0 %v95
  %v145 = vpop.f32.mrf.mxu0
  %v146 = vadd.f32 0.0, %v145
  %v147 = vpop.f32.mrf.mxu0
  %v148 = vadd.f32 0.0, %v147
  %149 = vdwg.mxu0
  %v150 = vld [vmem:[%s2] sm:$0x1]
  %v151 = vperm.slane %v150, 0
  %v152 = vmul.f32 %v111, %v151
  %v153 = vmul.f32 %v113, %v151
  %v154 = vmul.f32 %v116, %v151
  %v155 = vmul.f32 %v118, %v151
  %v156 = vmul.f32 %v121, %v151
  %v157 = vmul.f32 %v123, %v151
  %v158 = vmul.f32 %v126, %v151
  %v159 = vmul.f32 %v128, %v151
  %v160 = vmul.f32 %v131, %v151
  %v161 = vmul.f32 %v133, %v151
  %v162 = vmul.f32 %v136, %v151
  %v163 = vmul.f32 %v138, %v151
  %v164 = vmul.f32 %v141, %v151
  %v165 = vmul.f32 %v143, %v151
  %v166 = vmul.f32 %v146, %v151
  %v167 = vmul.f32 %v148, %v151
  %v168 = vld [vmem:[%s2 + $0x1] sm:$0x1]
  %v169 = vperm.slane %v168, 0
  %v170 = vadd.f32 %v152, %v169
  %v171 = vadd.f32 %v153, %v169
  %v172 = vadd.f32 %v154, %v169
  %v173 = vadd.f32 %v155, %v169
  %v174 = vadd.f32 %v156, %v169
  %v175 = vadd.f32 %v157, %v169
  %v176 = vadd.f32 %v158, %v169
  %v177 = vadd.f32 %v159, %v169
  %v178 = vadd.f32 %v160, %v169
  %v179 = vadd.f32 %v161, %v169
  %v180 = vadd.f32 %v162, %v169
  %v181 = vadd.f32 %v163, %v169
  %v182 = vadd.f32 %v164, %v169
  %v183 = vadd.f32 %v165, %v169
  %v184 = vadd.f32 %v166, %v169
  %v185 = vadd.f32 %v167, %v169
  %v186 = vpack.c.bf16 %v170, %v170
  %v187 = vpack.c.bf16 %v171, %v171
  %v188 = vpack.c.bf16 %v172, %v172
  %v189 = vpack.c.bf16 %v173, %v173
  %v190 = vpack.c.bf16 %v174, %v174
  %v191 = vpack.c.bf16 %v175, %v175
  %v192 = vpack.c.bf16 %v176, %v176
  %v193 = vpack.c.bf16 %v177, %v177
  %v194 = vpack.c.bf16 %v178, %v178
  %v195 = vpack.c.bf16 %v179, %v179
  %v196 = vpack.c.bf16 %v180, %v180
  %v197 = vpack.c.bf16 %v181, %v181
  %v198 = vpack.c.bf16 %v182, %v182
  %v199 = vpack.c.bf16 %v183, %v183
  %v200 = vpack.c.bf16 %v184, %v184
  %v201 = vpack.c.bf16 %v185, %v185
  %vm202 = vcmask 125952
  %203 = vst.msk [vmem:[%s3] sm:$0xf] %vm202, %v186
  %204 = vst.msk [vmem:[%s3 + $0x4] sm:$0xf] %vm202, %v187
  %205 = vst.msk [vmem:[%s3 + $0x8] sm:$0xf] %vm202, %v188
  %206 = vst.msk [vmem:[%s3 + $0xc] sm:$0xf] %vm202, %v189
  %207 = vst.msk [vmem:[%s3 + $0x10] sm:$0xf] %vm202, %v190
  %208 = vst.msk [vmem:[%s3 + $0x14] sm:$0xf] %vm202, %v191
  %209 = vst.msk [vmem:[%s3 + $0x18] sm:$0xf] %vm202, %v192
  %210 = vst.msk [vmem:[%s3 + $0x1c] sm:$0xf] %vm202, %v193
  %211 = vst.msk [vmem:[%s3 + $0x20] sm:$0xf] %vm202, %v194
  %212 = vst.msk [vmem:[%s3 + $0x24] sm:$0xf] %vm202, %v195
  %213 = vst.msk [vmem:[%s3 + $0x28] sm:$0xf] %vm202, %v196
  %214 = vst.msk [vmem:[%s3 + $0x2c] sm:$0xf] %vm202, %v197
  %215 = vst.msk [vmem:[%s3 + $0x30] sm:$0xf] %vm202, %v198
  %216 = vst.msk [vmem:[%s3 + $0x34] sm:$0xf] %vm202, %v199
  %217 = vst.msk [vmem:[%s3 + $0x38] sm:$0xf] %vm202, %v200
  %218 = vst.msk [vmem:[%s3 + $0x3c] sm:$0xf] %vm202, %v201
  // Predicated region
  $region14: #{bottleneck_forward.6} parent=0 // pred_check
    _
  $region15: #{bottleneck_forward.6} parent=0 // pred_check_branch
    %220 = sbr.rel (0) target = $region17
  $region16: #{bottleneck_forward.6} parent=0 // pred_region
    _
  $region17: #{bottleneck_forward.6} parent=0 // pred_fallthru
    _
  // Predicated region
  $region18: #{bottleneck_forward.6} parent=0 // pred_check
    _
  $region19: #{bottleneck_forward.6} parent=0 // pred_check_branch
    %222 = sbr.rel (0) target = $region21
  $region20: #{bottleneck_forward.6} parent=0 // pred_region
    _
  $region21: #{bottleneck_forward.6} parent=0 // pred_fallthru
    _

</llo_original>
